<compile_context>
chip_gen: v5e
topology: v5e:2x2
jax: 0.10.0
libtpu: 0.0.40
codegen_flags: <defaults>
</compile_context>

<pallas_src>
import functools

import jax
import jax.numpy as jnp
from jax import lax
from jax.experimental import pallas as pl
from jax.experimental.pallas import tpu as pltpu


def _sot_kernel(x1_ref, x2_ref, o_ref, *, n_blocks, reg):
    x1 = x1_ref[...]                              # (TB, N, D) f32
    x2 = x2_ref[...]                              # (TB, N, D) f32
    TB, N, D = x1.shape

    # ---- pairwise distances on the MXU: M2[b,i,j] = |x1_i|^2 + |x2_j|^2 - 2<x1_i, x2_j>
    x1sq = jnp.sum(x1 * x1, axis=-1, keepdims=True)                 # (TB, N, 1) lane-reduce
    ones_row = jnp.ones((TB, 1, D), jnp.float32)
    # (TB,1,N) row of |x2_j|^2 produced directly in lane layout via a tiny matvec (MXU idle anyway)
    x2sq = jnp.einsum("bod,bjd->boj", ones_row, x2 * x2,
                      preferred_element_type=jnp.float32)            # (TB, 1, N)
    g = jnp.einsum("bnd,bmd->bnm", x1, x2,
                   preferred_element_type=jnp.float32)               # (TB, N, N) on MXU
    M2 = x1sq + x2sq - 2.0 * g
    M = jnp.sqrt(jnp.maximum(M2, 0.0))            # clamp f32 cancellation before sqrt

    # ---- per-batch max-normalised Gibbs kernel, scalar-folded:  K = exp(M * (-1/(reg*Mmax)))
    Mmax = jnp.max(jnp.max(M, axis=2, keepdims=True), axis=1, keepdims=True)  # (TB,1,1)
    Mmax = jnp.maximum(Mmax, jnp.float32(1e-30))  # guard degenerate all-zero (padded) batches
    s = jnp.float32(-1.0 / reg) / Mmax
    K = jnp.exp(M * s)                            # (TB, N, N)

    inv_n = jnp.float32(1.0 / N)
    u0 = jnp.full((TB, N, 1), inv_n, jnp.float32)
    v0 = jnp.full((TB, 1, N), inv_n, jnp.float32)
    P0 = u0 * K * v0                              # initial transport plan

    def one_iter(_, carry):
        u, v, err = carry                         # err: int32 scalar
        # Kt @ u -> (TB,1,N); K @ v -> (TB,N,1)  (small N: broadcast + reduce form)
        KtU = jnp.sum(K * u, axis=1, keepdims=True)
        v_new = inv_n / KtU
        KV = jnp.sum(K * v_new, axis=2, keepdims=True)
        u_new = inv_n / KV
        # single combined non-finiteness test (catches NaN, Inf, and KtU == 0)
        bad_u = jnp.logical_not(jnp.abs(u_new) < jnp.inf)            # (TB, N, 1)
        bad_v = jnp.logical_not(jnp.abs(v_new) < jnp.inf)            # (TB, 1, N)
        err_now = jnp.maximum(
            jnp.max(jnp.max(bad_u.astype(jnp.float32), axis=-1)),
            jnp.max(jnp.max(bad_v.astype(jnp.float32), axis=-1))) > 0.0
        ok = jnp.logical_and(err == 0, jnp.logical_not(err_now))
        u = jnp.where(ok, u_new, u)               # on error keep uprev / vprev (reference)
        v = jnp.where(ok, v_new, v)
        err = jnp.where(err_now, jnp.int32(1), err)
        return (u, v, err)

    def cond(carry):
        blk, _, _, _, done = carry
        return jnp.logical_and(blk < n_blocks, done == 0)

    def block_body(carry):
        blk, u, v, P, done = carry
        # 10 Sinkhorn iterations, fully unrolled inside the while body
        u, v, err = lax.fori_loop(0, 10, one_iter, (u, v, jnp.int32(0)), unroll=True)
        # every-10-iterations checkpoint: refresh P and test convergence (tol 1e-5)
        P_new = u * K * v
        diff = jnp.max(jnp.max(jnp.abs(P - P_new), axis=-1))
        conv = diff < jnp.float32(1e-5)
        no_err = err == 0
        P = jnp.where(no_err, P_new, P)           # on numerical error: break, keep old P
        done = jnp.where(jnp.logical_or(jnp.logical_not(no_err), conv),
                         jnp.int32(1), done)
        return (blk + jnp.int32(1), u, v, P, done)

    init = (jnp.int32(0), u0, v0, P0, jnp.int32(0))
    _, _, _, P, _ = lax.while_loop(cond, block_body, init)

    # per-batch (M * P).sum(); one (TB,1,1) store per grid step, wrapper sums blocks
    MP = M * P
    o_ref[...] = jnp.sum(jnp.sum(MP, axis=2, keepdims=True), axis=1, keepdims=True)


def sot_forward(x1, x2, *, max_iters=100, reg=0.01, batch_block=8):
    """JAX/Pallas equivalent of SOT.forward(x1, x2) -> scalar."""
    if x1.ndim == 2:
        x1 = x1[None]
        x2 = x2[None]
    x1 = jnp.asarray(x1, jnp.float32)
    x2 = jnp.asarray(x2, jnp.float32)
    B, N, D = x1.shape

    # TB batch elements per grid step to amortise per-step overhead / fill lanes.
    # (Keep TB * N * N f32 working set (K, M, P, P_new) well under VMEM; TB=8 is
    #  conservative for N up to ~512 even on v7x's 64 MiB.)
    TB = min(batch_block, B)
    B_pad = ((B + TB - 1) // TB) * TB
    if B_pad != B:
        pad = B_pad - B
        zeros = jnp.zeros((pad, N, D), jnp.float32)
        # padded batches have M == 0 everywhere -> contribute exactly 0 to the sum
        x1 = jnp.concatenate([x1, zeros], axis=0)
        x2 = jnp.concatenate([x2, zeros], axis=0)

    # P only changes at the every-10-iteration checkpoints, so trailing
    # (max_iters % 10) iterations cannot affect the output -> run full blocks only.
    n_blocks = max_iters // 10

    kernel = functools.partial(_sot_kernel, n_blocks=n_blocks, reg=float(reg))

    per_batch = pl.pallas_call(
        kernel,
        out_shape=jax.ShapeDtypeStruct((B_pad, 1, 1), jnp.float32),
        grid_spec=pltpu.PrefetchScalarGridSpec(
            num_scalar_prefetch=0,
            grid=(B_pad // TB,),
            in_specs=[
                pl.BlockSpec((TB, N, D), lambda b: (b, 0, 0)),
                pl.BlockSpec((TB, N, D), lambda b: (b, 0, 0)),
            ],
            out_specs=pl.BlockSpec((TB, 1, 1), lambda b: (b, 0, 0)),
        ),
        compiler_params=pltpu.CompilerParams(
            dimension_semantics=("parallel",)),   # batch-block axis -> both TCs on v7x
    )(x1, x2)

    # (M * P).sum() over all batches / rows / cols
    return jnp.sum(per_batch)


if __name__ == "__main__":
    key = jax.random.PRNGKey(0)
    k1, k2 = jax.random.split(key)
    B, N, D = 2, 8, 32
    x1 = jax.random.normal(k1, (B, N, D), dtype=jnp.float32)
    # x2 close to x1 so the Gibbs kernel exp(-Mnorm/0.01) stays well-conditioned in f32
    x2 = x1 + 0.1 * jax.random.normal(k2, (B, N, D), dtype=jnp.float32)

    out = sot_forward(x1, x2, max_iters=100, reg=0.01)
    jax.block_until_ready(out)
    print("KERNEL_OK")
</pallas_src>

<mosaic_0001>
module attributes {stable_mosaic.version = 11 : i64} {
  func.func @_sot_kernel(%arg0: i32, %arg1: memref<2x8x32xf32, #tpu.memory_space<vmem>>, %arg2: memref<2x8x32xf32, #tpu.memory_space<vmem>>, %arg3: memref<2x1x1xf32, #tpu.memory_space<vmem>>) attributes {dimension_semantics = [#tpu.dimension_semantics<parallel>], iteration_bounds = array<i64: 1>, scalar_prefetch = 0 : i64, scratch_operands = 0 : i64, tpu.core_type = #tpu.core_type<tc>, window_params = [{transform_indices = @transform_0, window_bounds = array<i64: 2, 8, 32>}, {transform_indices = @transform_1, window_bounds = array<i64: 2, 8, 32>}, {transform_indices = @transform_2, window_bounds = array<i64: 2, 1, 1>}]} {
    %c0 = arith.constant 0 : index
    %c0_0 = arith.constant 0 : index
    %c0_1 = arith.constant 0 : index
    %0 = vector.load %arg1[%c0, %c0_0, %c0_1] : memref<2x8x32xf32, #tpu.memory_space<vmem>>, vector<2x8x32xf32>
    %c0_2 = arith.constant 0 : index
    %c0_3 = arith.constant 0 : index
    %c0_4 = arith.constant 0 : index
    %1 = vector.load %arg2[%c0_2, %c0_3, %c0_4] : memref<2x8x32xf32, #tpu.memory_space<vmem>>, vector<2x8x32xf32>
    %2 = arith.mulf %0, %0 : vector<2x8x32xf32>
    %cst = arith.constant dense<0.000000e+00> : vector<2x8xf32>
    %3 = vector.multi_reduction <add>, %2, %cst [2] : vector<2x8x32xf32> to vector<2x8xf32>
    %4 = vector.shape_cast %3 : vector<2x8xf32> to vector<2x8x1xf32>
    %cst_5 = arith.constant 1.000000e+00 : f32
    %5 = vector.broadcast %cst_5 : f32 to vector<2x1x32xf32>
    %6 = arith.mulf %1, %1 : vector<2x8x32xf32>
    "tpu.trace_start"() <{level = 10 : i32, message = "bod,bjd->boj"}> : () -> ()
    %cst_6 = arith.constant dense<0.000000e+00> : vector<2x1x8xf32>
    %7 = tpu.matmul %5, %6, %cst_6 {dimension_numbers = #tpu.dot_dimension_numbers<[2], [2], [1], [1], [0, 0, 0, 1, 1, 1], [0], [0]>} : vector<2x1x32xf32>, vector<2x8x32xf32>, vector<2x1x8xf32> -> vector<2x1x8xf32>
    "tpu.trace_stop"() : () -> ()
    "tpu.trace_start"() <{level = 10 : i32, message = "bnd,bmd->bnm"}> : () -> ()
    %cst_7 = arith.constant dense<0.000000e+00> : vector<2x8x8xf32>
    %8 = tpu.matmul %0, %1, %cst_7 {dimension_numbers = #tpu.dot_dimension_numbers<[2], [2], [1], [1], [0, 0, 0, 1, 1, 1], [0], [0]>} : vector<2x8x32xf32>, vector<2x8x32xf32>, vector<2x8x8xf32> -> vector<2x8x8xf32>
    "tpu.trace_stop"() : () -> ()
    %9 = vector.broadcast %4 : vector<2x8x1xf32> to vector<2x8x8xf32>
    %10 = vector.broadcast %7 : vector<2x1x8xf32> to vector<2x8x8xf32>
    %11 = arith.addf %9, %10 : vector<2x8x8xf32>
    %cst_8 = arith.constant 2.000000e+00 : f32
    %12 = vector.broadcast %cst_8 : f32 to vector<2x8x8xf32>
    %13 = arith.mulf %12, %8 : vector<2x8x8xf32>
    %14 = arith.subf %11, %13 : vector<2x8x8xf32>
    %cst_9 = arith.constant 0.000000e+00 : f32
    %15 = vector.broadcast %cst_9 : f32 to vector<2x8x8xf32>
    %16 = arith.maximumf %14, %15 : vector<2x8x8xf32>
    %17 = math.sqrt %16 : vector<2x8x8xf32>
    %cst_10 = arith.constant dense<0xFF800000> : vector<2x8xf32>
    %18 = vector.multi_reduction <maximumf>, %17, %cst_10 [2] : vector<2x8x8xf32> to vector<2x8xf32>
    %19 = vector.shape_cast %18 : vector<2x8xf32> to vector<2x8x1xf32>
    %cst_11 = arith.constant dense<0xFF800000> : vector<2x1xf32>
    %20 = vector.multi_reduction <maximumf>, %19, %cst_11 [1] : vector<2x8x1xf32> to vector<2x1xf32>
    %21 = vector.shape_cast %20 : vector<2x1xf32> to vector<2x1x1xf32>
    %cst_12 = arith.constant 1.000000e-30 : f32
    %22 = vector.broadcast %cst_12 : f32 to vector<2x1x1xf32>
    %23 = arith.maximumf %21, %22 : vector<2x1x1xf32>
    %cst_13 = arith.constant -1.000000e+02 : f32
    %24 = vector.broadcast %cst_13 : f32 to vector<2x1x1xf32>
    %25 = arith.divf %24, %23 : vector<2x1x1xf32>
    %26 = vector.broadcast %25 : vector<2x1x1xf32> to vector<2x8x8xf32>
    %27 = arith.mulf %17, %26 : vector<2x8x8xf32>
    %28 = math.exp %27 : vector<2x8x8xf32>
    %cst_14 = arith.constant 1.250000e-01 : f32
    %29 = vector.broadcast %cst_14 : f32 to vector<2x8x1xf32>
    %cst_15 = arith.constant 1.250000e-01 : f32
    %30 = vector.broadcast %cst_15 : f32 to vector<2x1x8xf32>
    %31 = vector.broadcast %29 : vector<2x8x1xf32> to vector<2x8x8xf32>
    %32 = arith.mulf %31, %28 : vector<2x8x8xf32>
    %33 = vector.broadcast %30 : vector<2x1x8xf32> to vector<2x8x8xf32>
    %34 = arith.mulf %32, %33 : vector<2x8x8xf32>
    %cst_16 = arith.constant 1.250000e-01 : f32
    %c0_i32 = arith.constant 0 : i32
    %c0_i32_17 = arith.constant 0 : i32
    %35:5 = scf.while (%arg4 = %c0_i32, %arg5 = %29, %arg6 = %30, %arg7 = %34, %arg8 = %c0_i32_17) : (i32, vector<2x8x1xf32>, vector<2x1x8xf32>, vector<2x8x8xf32>, i32) -> (i32, vector<2x8x1xf32>, vector<2x1x8xf32>, vector<2x8x8xf32>, i32) {
      %c10_i32 = arith.constant 10 : i32
      %42 = arith.cmpi slt, %arg4, %c10_i32 : i32
      %c0_i32_23 = arith.constant 0 : i32
      %43 = arith.cmpi eq, %arg8, %c0_i32_23 : i32
      %44 = arith.andi %42, %43 : i1
      scf.condition(%44) %arg4, %arg5, %arg6, %arg7, %arg8 : i32, vector<2x8x1xf32>, vector<2x1x8xf32>, vector<2x8x8xf32>, i32
    } do {
    ^bb0(%arg4: i32, %arg5: vector<2x8x1xf32>, %arg6: vector<2x1x8xf32>, %arg7: vector<2x8x8xf32>, %arg8: i32):
      %c0_i32_23 = arith.constant 0 : i32
      %c0_i32_24 = arith.constant 0 : i32
      %42 = vector.broadcast %arg5 : vector<2x8x1xf32> to vector<2x8x8xf32>
      %43 = arith.mulf %28, %42 : vector<2x8x8xf32>
      %cst_25 = arith.constant dense<0.000000e+00> : vector<2x8xf32>
      %44 = vector.multi_reduction <add>, %43, %cst_25 [1] : vector<2x8x8xf32> to vector<2x8xf32>
      %45 = vector.shape_cast %44 : vector<2x8xf32> to vector<2x1x8xf32>
      %46 = vector.broadcast %cst_16 : f32 to vector<2x1x8xf32>
      %47 = arith.divf %46, %45 : vector<2x1x8xf32>
      %48 = vector.broadcast %47 : vector<2x1x8xf32> to vector<2x8x8xf32>
      %49 = arith.mulf %28, %48 : vector<2x8x8xf32>
      %cst_26 = arith.constant dense<0.000000e+00> : vector<2x8xf32>
      %50 = vector.multi_reduction <add>, %49, %cst_26 [2] : vector<2x8x8xf32> to vector<2x8xf32>
      %51 = vector.shape_cast %50 : vector<2x8xf32> to vector<2x8x1xf32>
      %52 = vector.broadcast %cst_16 : f32 to vector<2x8x1xf32>
      %53 = arith.divf %52, %51 : vector<2x8x1xf32>
      %54 = math.absf %53 : vector<2x8x1xf32>
      %cst_27 = arith.constant 0x7F800000 : f32
      %55 = vector.broadcast %cst_27 : f32 to vector<2x8x1xf32>
      %56 = arith.cmpf olt, %54, %55 : vector<2x8x1xf32>
      %cst_28 = arith.constant dense<true> : vector<2x8x1xi1>
      %57 = arith.xori %56, %cst_28 : vector<2x8x1xi1>
      %58 = math.absf %47 : vector<2x1x8xf32>
      %cst_29 = arith.constant 0x7F800000 : f32
      %59 = vector.broadcast %cst_29 : f32 to vector<2x1x8xf32>
      %60 = arith.cmpf olt, %58, %59 : vector<2x1x8xf32>
      %cst_30 = arith.constant dense<true> : vector<2x1x8xi1>
      %61 = arith.xori %60, %cst_30 : vector<2x1x8xi1>
      %62 = arith.extui %57 : vector<2x8x1xi1> to vector<2x8x1xi32>
      %63 = arith.sitofp %62 : vector<2x8x1xi32> to vector<2x8x1xf32>
      %cst_31 = arith.constant dense<0xFF800000> : vector<2x8xf32>
      %64 = vector.multi_reduction <maximumf>, %63, %cst_31 [2] : vector<2x8x1xf32> to vector<2x8xf32>
      %65 = vector.shape_cast %64 : vector<2x8xf32> to vector<1x2x8xf32>
      %cst_32 = arith.constant dense<0xFF800000> : vector<1xf32>
      %66 = vector.multi_reduction <maximumf>, %65, %cst_32 [1, 2] : vector<1x2x8xf32> to vector<1xf32>
      %67 = vector.shape_cast %66 : vector<1xf32> to vector<1x1x1xf32>
      %68 = vector.extract %67[0, 0, 0] : f32 from vector<1x1x1xf32>
      %69 = arith.extui %61 : vector<2x1x8xi1> to vector<2x1x8xi32>
      %70 = arith.sitofp %69 : vector<2x1x8xi32> to vector<2x1x8xf32>
      %cst_33 = arith.constant dense<0xFF800000> : vector<2x1xf32>
      %71 = vector.multi_reduction <maximumf>, %70, %cst_33 [2] : vector<2x1x8xf32> to vector<2x1xf32>
      %72 = vector.shape_cast %71 : vector<2x1xf32> to vector<1x2x1xf32>
      %cst_34 = arith.constant dense<0xFF800000> : vector<1xf32>
      %73 = vector.multi_reduction <maximumf>, %72, %cst_34 [1, 2] : vector<1x2x1xf32> to vector<1xf32>
      %74 = vector.shape_cast %73 : vector<1xf32> to vector<1x1x1xf32>
      %75 = vector.extract %74[0, 0, 0] : f32 from vector<1x1x1xf32>
      %76 = arith.maximumf %68, %75 : f32
      %cst_35 = arith.constant 0.000000e+00 : f32
      %77 = arith.cmpf ogt, %76, %cst_35 : f32
      %c0_i32_36 = arith.constant 0 : i32
      %78 = arith.cmpi eq, %c0_i32_23, %c0_i32_36 : i32
      %true = arith.constant true
      %79 = arith.xori %77, %true : i1
      %80 = arith.andi %78, %79 : i1
      %81 = arith.select %80, %53, %arg5 : vector<2x8x1xf32>
      %82 = arith.select %80, %47, %arg6 : vector<2x1x8xf32>
      %c1_i32 = arith.constant 1 : i32
      %83 = arith.select %77, %c1_i32, %c0_i32_23 : i32
      %c1_i32_37 = arith.constant 1 : i32
      %84 = vector.broadcast %81 : vector<2x8x1xf32> to vector<2x8x8xf32>
      %85 = arith.mulf %28, %84 : vector<2x8x8xf32>
      %cst_38 = arith.constant dense<0.000000e+00> : vector<2x8xf32>
      %86 = vector.multi_reduction <add>, %85, %cst_38 [1] : vector<2x8x8xf32> to vector<2x8xf32>
      %87 = vector.shape_cast %86 : vector<2x8xf32> to vector<2x1x8xf32>
      %88 = vector.broadcast %cst_16 : f32 to vector<2x1x8xf32>
      %89 = arith.divf %88, %87 : vector<2x1x8xf32>
      %90 = vector.broadcast %89 : vector<2x1x8xf32> to vector<2x8x8xf32>
      %91 = arith.mulf %28, %90 : vector<2x8x8xf32>
      %cst_39 = arith.constant dense<0.000000e+00> : vector<2x8xf32>
      %92 = vector.multi_reduction <add>, %91, %cst_39 [2] : vector<2x8x8xf32> to vector<2x8xf32>
      %93 = vector.shape_cast %92 : vector<2x8xf32> to vector<2x8x1xf32>
      %94 = vector.broadcast %cst_16 : f32 to vector<2x8x1xf32>
      %95 = arith.divf %94, %93 : vector<2x8x1xf32>
      %96 = math.absf %95 : vector<2x8x1xf32>
      %cst_40 = arith.constant 0x7F800000 : f32
      %97 = vector.broadcast %cst_40 : f32 to vector<2x8x1xf32>
      %98 = arith.cmpf olt, %96, %97 : vector<2x8x1xf32>
      %cst_41 = arith.constant dense<true> : vector<2x8x1xi1>
      %99 = arith.xori %98, %cst_41 : vector<2x8x1xi1>
      %100 = math.absf %89 : vector<2x1x8xf32>
      %cst_42 = arith.constant 0x7F800000 : f32
      %101 = vector.broadcast %cst_42 : f32 to vector<2x1x8xf32>
      %102 = arith.cmpf olt, %100, %101 : vector<2x1x8xf32>
      %cst_43 = arith.constant dense<true> : vector<2x1x8xi1>
      %103 = arith.xori %102, %cst_43 : vector<2x1x8xi1>
      %104 = arith.extui %99 : vector<2x8x1xi1> to vector<2x8x1xi32>
      %105 = arith.sitofp %104 : vector<2x8x1xi32> to vector<2x8x1xf32>
      %cst_44 = arith.constant dense<0xFF800000> : vector<2x8xf32>
      %106 = vector.multi_reduction <maximumf>, %105, %cst_44 [2] : vector<2x8x1xf32> to vector<2x8xf32>
      %107 = vector.shape_cast %106 : vector<2x8xf32> to vector<1x2x8xf32>
      %cst_45 = arith.constant dense<0xFF800000> : vector<1xf32>
      %108 = vector.multi_reduction <maximumf>, %107, %cst_45 [1, 2] : vector<1x2x8xf32> to vector<1xf32>
      %109 = vector.shape_cast %108 : vector<1xf32> to vector<1x1x1xf32>
      %110 = vector.extract %109[0, 0, 0] : f32 from vector<1x1x1xf32>
      %111 = arith.extui %103 : vector<2x1x8xi1> to vector<2x1x8xi32>
      %112 = arith.sitofp %111 : vector<2x1x8xi32> to vector<2x1x8xf32>
      %cst_46 = arith.constant dense<0xFF800000> : vector<2x1xf32>
      %113 = vector.multi_reduction <maximumf>, %112, %cst_46 [2] : vector<2x1x8xf32> to vector<2x1xf32>
      %114 = vector.shape_cast %113 : vector<2x1xf32> to vector<1x2x1xf32>
      %cst_47 = arith.constant dense<0xFF800000> : vector<1xf32>
      %115 = vector.multi_reduction <maximumf>, %114, %cst_47 [1, 2] : vector<1x2x1xf32> to vector<1xf32>
      %116 = vector.shape_cast %115 : vector<1xf32> to vector<1x1x1xf32>
      %117 = vector.extract %116[0, 0, 0] : f32 from vector<1x1x1xf32>
      %118 = arith.maximumf %110, %117 : f32
      %cst_48 = arith.constant 0.000000e+00 : f32
      %119 = arith.cmpf ogt, %118, %cst_48 : f32
      %c0_i32_49 = arith.constant 0 : i32
      %120 = arith.cmpi eq, %83, %c0_i32_49 : i32
      %true_50 = arith.constant true
      %121 = arith.xori %119, %true_50 : i1
      %122 = arith.andi %120, %121 : i1
      %123 = arith.select %122, %95, %81 : vector<2x8x1xf32>
      %124 = arith.select %122, %89, %82 : vector<2x1x8xf32>
      %c1_i32_51 = arith.constant 1 : i32
      %125 = arith.select %119, %c1_i32_51, %83 : i32
      %c2_i32 = arith.constant 2 : i32
      %126 = vector.broadcast %123 : vector<2x8x1xf32> to vector<2x8x8xf32>
      %127 = arith.mulf %28, %126 : vector<2x8x8xf32>
      %cst_52 = arith.constant dense<0.000000e+00> : vector<2x8xf32>
      %128 = vector.multi_reduction <add>, %127, %cst_52 [1] : vector<2x8x8xf32> to vector<2x8xf32>
      %129 = vector.shape_cast %128 : vector<2x8xf32> to vector<2x1x8xf32>
      %130 = vector.broadcast %cst_16 : f32 to vector<2x1x8xf32>
      %131 = arith.divf %130, %129 : vector<2x1x8xf32>
      %132 = vector.broadcast %131 : vector<2x1x8xf32> to vector<2x8x8xf32>
      %133 = arith.mulf %28, %132 : vector<2x8x8xf32>
      %cst_53 = arith.constant dense<0.000000e+00> : vector<2x8xf32>
      %134 = vector.multi_reduction <add>, %133, %cst_53 [2] : vector<2x8x8xf32> to vector<2x8xf32>
      %135 = vector.shape_cast %134 : vector<2x8xf32> to vector<2x8x1xf32>
      %136 = vector.broadcast %cst_16 : f32 to vector<2x8x1xf32>
      %137 = arith.divf %136, %135 : vector<2x8x1xf32>
      %138 = math.absf %137 : vector<2x8x1xf32>
      %cst_54 = arith.constant 0x7F800000 : f32
      %139 = vector.broadcast %cst_54 : f32 to vector<2x8x1xf32>
      %140 = arith.cmpf olt, %138, %139 : vector<2x8x1xf32>
      %cst_55 = arith.constant dense<true> : vector<2x8x1xi1>
      %141 = arith.xori %140, %cst_55 : vector<2x8x1xi1>
      %142 = math.absf %131 : vector<2x1x8xf32>
      %cst_56 = arith.constant 0x7F800000 : f32
      %143 = vector.broadcast %cst_56 : f32 to vector<2x1x8xf32>
      %144 = arith.cmpf olt, %142, %143 : vector<2x1x8xf32>
      %cst_57 = arith.constant dense<true> : vector<2x1x8xi1>
      %145 = arith.xori %144, %cst_57 : vector<2x1x8xi1>
      %146 = arith.extui %141 : vector<2x8x1xi1> to vector<2x8x1xi32>
      %147 = arith.sitofp %146 : vector<2x8x1xi32> to vector<2x8x1xf32>
      %cst_58 = arith.constant dense<0xFF800000> : vector<2x8xf32>
      %148 = vector.multi_reduction <maximumf>, %147, %cst_58 [2] : vector<2x8x1xf32> to vector<2x8xf32>
      %149 = vector.shape_cast %148 : vector<2x8xf32> to vector<1x2x8xf32>
      %cst_59 = arith.constant dense<0xFF800000> : vector<1xf32>
      %150 = vector.multi_reduction <maximumf>, %149, %cst_59 [1, 2] : vector<1x2x8xf32> to vector<1xf32>
      %151 = vector.shape_cast %150 : vector<1xf32> to vector<1x1x1xf32>
      %152 = vector.extract %151[0, 0, 0] : f32 from vector<1x1x1xf32>
      %153 = arith.extui %145 : vector<2x1x8xi1> to vector<2x1x8xi32>
      %154 = arith.sitofp %153 : vector<2x1x8xi32> to vector<2x1x8xf32>
      %cst_60 = arith.constant dense<0xFF800000> : vector<2x1xf32>
      %155 = vector.multi_reduction <maximumf>, %154, %cst_60 [2] : vector<2x1x8xf32> to vector<2x1xf32>
      %156 = vector.shape_cast %155 : vector<2x1xf32> to vector<1x2x1xf32>
      %cst_61 = arith.constant dense<0xFF800000> : vector<1xf32>
      %157 = vector.multi_reduction <maximumf>, %156, %cst_61 [1, 2] : vector<1x2x1xf32> to vector<1xf32>
      %158 = vector.shape_cast %157 : vector<1xf32> to vector<1x1x1xf32>
      %159 = vector.extract %158[0, 0, 0] : f32 from vector<1x1x1xf32>
      %160 = arith.maximumf %152, %159 : f32
      %cst_62 = arith.constant 0.000000e+00 : f32
      %161 = arith.cmpf ogt, %160, %cst_62 : f32
      %c0_i32_63 = arith.constant 0 : i32
      %162 = arith.cmpi eq, %125, %c0_i32_63 : i32
      %true_64 = arith.constant true
      %163 = arith.xori %161, %true_64 : i1
      %164 = arith.andi %162, %163 : i1
      %165 = arith.select %164, %137, %123 : vector<2x8x1xf32>
      %166 = arith.select %164, %131, %124 : vector<2x1x8xf32>
      %c1_i32_65 = arith.constant 1 : i32
      %167 = arith.select %161, %c1_i32_65, %125 : i32
      %c3_i32 = arith.constant 3 : i32
      %168 = vector.broadcast %165 : vector<2x8x1xf32> to vector<2x8x8xf32>
      %169 = arith.mulf %28, %168 : vector<2x8x8xf32>
      %cst_66 = arith.constant dense<0.000000e+00> : vector<2x8xf32>
      %170 = vector.multi_reduction <add>, %169, %cst_66 [1] : vector<2x8x8xf32> to vector<2x8xf32>
      %171 = vector.shape_cast %170 : vector<2x8xf32> to vector<2x1x8xf32>
      %172 = vector.broadcast %cst_16 : f32 to vector<2x1x8xf32>
      %173 = arith.divf %172, %171 : vector<2x1x8xf32>
      %174 = vector.broadcast %173 : vector<2x1x8xf32> to vector<2x8x8xf32>
      %175 = arith.mulf %28, %174 : vector<2x8x8xf32>
      %cst_67 = arith.constant dense<0.000000e+00> : vector<2x8xf32>
      %176 = vector.multi_reduction <add>, %175, %cst_67 [2] : vector<2x8x8xf32> to vector<2x8xf32>
      %177 = vector.shape_cast %176 : vector<2x8xf32> to vector<2x8x1xf32>
      %178 = vector.broadcast %cst_16 : f32 to vector<2x8x1xf32>
      %179 = arith.divf %178, %177 : vector<2x8x1xf32>
      %180 = math.absf %179 : vector<2x8x1xf32>
      %cst_68 = arith.constant 0x7F800000 : f32
      %181 = vector.broadcast %cst_68 : f32 to vector<2x8x1xf32>
      %182 = arith.cmpf olt, %180, %181 : vector<2x8x1xf32>
      %cst_69 = arith.constant dense<true> : vector<2x8x1xi1>
      %183 = arith.xori %182, %cst_69 : vector<2x8x1xi1>
      %184 = math.absf %173 : vector<2x1x8xf32>
      %cst_70 = arith.constant 0x7F800000 : f32
      %185 = vector.broadcast %cst_70 : f32 to vector<2x1x8xf32>
      %186 = arith.cmpf olt, %184, %185 : vector<2x1x8xf32>
      %cst_71 = arith.constant dense<true> : vector<2x1x8xi1>
      %187 = arith.xori %186, %cst_71 : vector<2x1x8xi1>
      %188 = arith.extui %183 : vector<2x8x1xi1> to vector<2x8x1xi32>
      %189 = arith.sitofp %188 : vector<2x8x1xi32> to vector<2x8x1xf32>
      %cst_72 = arith.constant dense<0xFF800000> : vector<2x8xf32>
      %190 = vector.multi_reduction <maximumf>, %189, %cst_72 [2] : vector<2x8x1xf32> to vector<2x8xf32>
      %191 = vector.shape_cast %190 : vector<2x8xf32> to vector<1x2x8xf32>
      %cst_73 = arith.constant dense<0xFF800000> : vector<1xf32>
      %192 = vector.multi_reduction <maximumf>, %191, %cst_73 [1, 2] : vector<1x2x8xf32> to vector<1xf32>
      %193 = vector.shape_cast %192 : vector<1xf32> to vector<1x1x1xf32>
      %194 = vector.extract %193[0, 0, 0] : f32 from vector<1x1x1xf32>
      %195 = arith.extui %187 : vector<2x1x8xi1> to vector<2x1x8xi32>
      %196 = arith.sitofp %195 : vector<2x1x8xi32> to vector<2x1x8xf32>
      %cst_74 = arith.constant dense<0xFF800000> : vector<2x1xf32>
      %197 = vector.multi_reduction <maximumf>, %196, %cst_74 [2] : vector<2x1x8xf32> to vector<2x1xf32>
      %198 = vector.shape_cast %197 : vector<2x1xf32> to vector<1x2x1xf32>
      %cst_75 = arith.constant dense<0xFF800000> : vector<1xf32>
      %199 = vector.multi_reduction <maximumf>, %198, %cst_75 [1, 2] : vector<1x2x1xf32> to vector<1xf32>
      %200 = vector.shape_cast %199 : vector<1xf32> to vector<1x1x1xf32>
      %201 = vector.extract %200[0, 0, 0] : f32 from vector<1x1x1xf32>
      %202 = arith.maximumf %194, %201 : f32
      %cst_76 = arith.constant 0.000000e+00 : f32
      %203 = arith.cmpf ogt, %202, %cst_76 : f32
      %c0_i32_77 = arith.constant 0 : i32
      %204 = arith.cmpi eq, %167, %c0_i32_77 : i32
      %true_78 = arith.constant true
      %205 = arith.xori %203, %true_78 : i1
      %206 = arith.andi %204, %205 : i1
      %207 = arith.select %206, %179, %165 : vector<2x8x1xf32>
      %208 = arith.select %206, %173, %166 : vector<2x1x8xf32>
      %c1_i32_79 = arith.constant 1 : i32
      %209 = arith.select %203, %c1_i32_79, %167 : i32
      %c4_i32 = arith.constant 4 : i32
      %210 = vector.broadcast %207 : vector<2x8x1xf32> to vector<2x8x8xf32>
      %211 = arith.mulf %28, %210 : vector<2x8x8xf32>
      %cst_80 = arith.constant dense<0.000000e+00> : vector<2x8xf32>
      %212 = vector.multi_reduction <add>, %211, %cst_80 [1] : vector<2x8x8xf32> to vector<2x8xf32>
      %213 = vector.shape_cast %212 : vector<2x8xf32> to vector<2x1x8xf32>
      %214 = vector.broadcast %cst_16 : f32 to vector<2x1x8xf32>
      %215 = arith.divf %214, %213 : vector<2x1x8xf32>
      %216 = vector.broadcast %215 : vector<2x1x8xf32> to vector<2x8x8xf32>
      %217 = arith.mulf %28, %216 : vector<2x8x8xf32>
      %cst_81 = arith.constant dense<0.000000e+00> : vector<2x8xf32>
      %218 = vector.multi_reduction <add>, %217, %cst_81 [2] : vector<2x8x8xf32> to vector<2x8xf32>
      %219 = vector.shape_cast %218 : vector<2x8xf32> to vector<2x8x1xf32>
      %220 = vector.broadcast %cst_16 : f32 to vector<2x8x1xf32>
      %221 = arith.divf %220, %219 : vector<2x8x1xf32>
      %222 = math.absf %221 : vector<2x8x1xf32>
      %cst_82 = arith.constant 0x7F800000 : f32
      %223 = vector.broadcast %cst_82 : f32 to vector<2x8x1xf32>
      %224 = arith.cmpf olt, %222, %223 : vector<2x8x1xf32>
      %cst_83 = arith.constant dense<true> : vector<2x8x1xi1>
      %225 = arith.xori %224, %cst_83 : vector<2x8x1xi1>
      %226 = math.absf %215 : vector<2x1x8xf32>
      %cst_84 = arith.constant 0x7F800000 : f32
      %227 = vector.broadcast %cst_84 : f32 to vector<2x1x8xf32>
      %228 = arith.cmpf olt, %226, %227 : vector<2x1x8xf32>
      %cst_85 = arith.constant dense<true> : vector<2x1x8xi1>
      %229 = arith.xori %228, %cst_85 : vector<2x1x8xi1>
      %230 = arith.extui %225 : vector<2x8x1xi1> to vector<2x8x1xi32>
      %231 = arith.sitofp %230 : vector<2x8x1xi32> to vector<2x8x1xf32>
      %cst_86 = arith.constant dense<0xFF800000> : vector<2x8xf32>
      %232 = vector.multi_reduction <maximumf>, %231, %cst_86 [2] : vector<2x8x1xf32> to vector<2x8xf32>
      %233 = vector.shape_cast %232 : vector<2x8xf32> to vector<1x2x8xf32>
      %cst_87 = arith.constant dense<0xFF800000> : vector<1xf32>
      %234 = vector.multi_reduction <maximumf>, %233, %cst_87 [1, 2] : vector<1x2x8xf32> to vector<1xf32>
      %235 = vector.shape_cast %234 : vector<1xf32> to vector<1x1x1xf32>
      %236 = vector.extract %235[0, 0, 0] : f32 from vector<1x1x1xf32>
      %237 = arith.extui %229 : vector<2x1x8xi1> to vector<2x1x8xi32>
      %238 = arith.sitofp %237 : vector<2x1x8xi32> to vector<2x1x8xf32>
      %cst_88 = arith.constant dense<0xFF800000> : vector<2x1xf32>
      %239 = vector.multi_reduction <maximumf>, %238, %cst_88 [2] : vector<2x1x8xf32> to vector<2x1xf32>
      %240 = vector.shape_cast %239 : vector<2x1xf32> to vector<1x2x1xf32>
      %cst_89 = arith.constant dense<0xFF800000> : vector<1xf32>
      %241 = vector.multi_reduction <maximumf>, %240, %cst_89 [1, 2] : vector<1x2x1xf32> to vector<1xf32>
      %242 = vector.shape_cast %241 : vector<1xf32> to vector<1x1x1xf32>
      %243 = vector.extract %242[0, 0, 0] : f32 from vector<1x1x1xf32>
      %244 = arith.maximumf %236, %243 : f32
      %cst_90 = arith.constant 0.000000e+00 : f32
      %245 = arith.cmpf ogt, %244, %cst_90 : f32
      %c0_i32_91 = arith.constant 0 : i32
      %246 = arith.cmpi eq, %209, %c0_i32_91 : i32
      %true_92 = arith.constant true
      %247 = arith.xori %245, %true_92 : i1
      %248 = arith.andi %246, %247 : i1
      %249 = arith.select %248, %221, %207 : vector<2x8x1xf32>
      %250 = arith.select %248, %215, %208 : vector<2x1x8xf32>
      %c1_i32_93 = arith.constant 1 : i32
      %251 = arith.select %245, %c1_i32_93, %209 : i32
      %c5_i32 = arith.constant 5 : i32
      %252 = vector.broadcast %249 : vector<2x8x1xf32> to vector<2x8x8xf32>
      %253 = arith.mulf %28, %252 : vector<2x8x8xf32>
      %cst_94 = arith.constant dense<0.000000e+00> : vector<2x8xf32>
      %254 = vector.multi_reduction <add>, %253, %cst_94 [1] : vector<2x8x8xf32> to vector<2x8xf32>
      %255 = vector.shape_cast %254 : vector<2x8xf32> to vector<2x1x8xf32>
      %256 = vector.broadcast %cst_16 : f32 to vector<2x1x8xf32>
      %257 = arith.divf %256, %255 : vector<2x1x8xf32>
      %258 = vector.broadcast %257 : vector<2x1x8xf32> to vector<2x8x8xf32>
      %259 = arith.mulf %28, %258 : vector<2x8x8xf32>
      %cst_95 = arith.constant dense<0.000000e+00> : vector<2x8xf32>
      %260 = vector.multi_reduction <add>, %259, %cst_95 [2] : vector<2x8x8xf32> to vector<2x8xf32>
      %261 = vector.shape_cast %260 : vector<2x8xf32> to vector<2x8x1xf32>
      %262 = vector.broadcast %cst_16 : f32 to vector<2x8x1xf32>
      %263 = arith.divf %262, %261 : vector<2x8x1xf32>
      %264 = math.absf %263 : vector<2x8x1xf32>
      %cst_96 = arith.constant 0x7F800000 : f32
      %265 = vector.broadcast %cst_96 : f32 to vector<2x8x1xf32>
      %266 = arith.cmpf olt, %264, %265 : vector<2x8x1xf32>
      %cst_97 = arith.constant dense<true> : vector<2x8x1xi1>
      %267 = arith.xori %266, %cst_97 : vector<2x8x1xi1>
      %268 = math.absf %257 : vector<2x1x8xf32>
      %cst_98 = arith.constant 0x7F800000 : f32
      %269 = vector.broadcast %cst_98 : f32 to vector<2x1x8xf32>
      %270 = arith.cmpf olt, %268, %269 : vector<2x1x8xf32>
      %cst_99 = arith.constant dense<true> : vector<2x1x8xi1>
      %271 = arith.xori %270, %cst_99 : vector<2x1x8xi1>
      %272 = arith.extui %267 : vector<2x8x1xi1> to vector<2x8x1xi32>
      %273 = arith.sitofp %272 : vector<2x8x1xi32> to vector<2x8x1xf32>
      %cst_100 = arith.constant dense<0xFF800000> : vector<2x8xf32>
      %274 = vector.multi_reduction <maximumf>, %273, %cst_100 [2] : vector<2x8x1xf32> to vector<2x8xf32>
      %275 = vector.shape_cast %274 : vector<2x8xf32> to vector<1x2x8xf32>
      %cst_101 = arith.constant dense<0xFF800000> : vector<1xf32>
      %276 = vector.multi_reduction <maximumf>, %275, %cst_101 [1, 2] : vector<1x2x8xf32> to vector<1xf32>
      %277 = vector.shape_cast %276 : vector<1xf32> to vector<1x1x1xf32>
      %278 = vector.extract %277[0, 0, 0] : f32 from vector<1x1x1xf32>
      %279 = arith.extui %271 : vector<2x1x8xi1> to vector<2x1x8xi32>
      %280 = arith.sitofp %279 : vector<2x1x8xi32> to vector<2x1x8xf32>
      %cst_102 = arith.constant dense<0xFF800000> : vector<2x1xf32>
      %281 = vector.multi_reduction <maximumf>, %280, %cst_102 [2] : vector<2x1x8xf32> to vector<2x1xf32>
      %282 = vector.shape_cast %281 : vector<2x1xf32> to vector<1x2x1xf32>
      %cst_103 = arith.constant dense<0xFF800000> : vector<1xf32>
      %283 = vector.multi_reduction <maximumf>, %282, %cst_103 [1, 2] : vector<1x2x1xf32> to vector<1xf32>
      %284 = vector.shape_cast %283 : vector<1xf32> to vector<1x1x1xf32>
      %285 = vector.extract %284[0, 0, 0] : f32 from vector<1x1x1xf32>
      %286 = arith.maximumf %278, %285 : f32
      %cst_104 = arith.constant 0.000000e+00 : f32
      %287 = arith.cmpf ogt, %286, %cst_104 : f32
      %c0_i32_105 = arith.constant 0 : i32
      %288 = arith.cmpi eq, %251, %c0_i32_105 : i32
      %true_106 = arith.constant true
      %289 = arith.xori %287, %true_106 : i1
      %290 = arith.andi %288, %289 : i1
      %291 = arith.select %290, %263, %249 : vector<2x8x1xf32>
      %292 = arith.select %290, %257, %250 : vector<2x1x8xf32>
      %c1_i32_107 = arith.constant 1 : i32
      %293 = arith.select %287, %c1_i32_107, %251 : i32
      %c6_i32 = arith.constant 6 : i32
      %294 = vector.broadcast %291 : vector<2x8x1xf32> to vector<2x8x8xf32>
      %295 = arith.mulf %28, %294 : vector<2x8x8xf32>
      %cst_108 = arith.constant dense<0.000000e+00> : vector<2x8xf32>
      %296 = vector.multi_reduction <add>, %295, %cst_108 [1] : vector<2x8x8xf32> to vector<2x8xf32>
      %297 = vector.shape_cast %296 : vector<2x8xf32> to vector<2x1x8xf32>
      %298 = vector.broadcast %cst_16 : f32 to vector<2x1x8xf32>
      %299 = arith.divf %298, %297 : vector<2x1x8xf32>
      %300 = vector.broadcast %299 : vector<2x1x8xf32> to vector<2x8x8xf32>
      %301 = arith.mulf %28, %300 : vector<2x8x8xf32>
      %cst_109 = arith.constant dense<0.000000e+00> : vector<2x8xf32>
      %302 = vector.multi_reduction <add>, %301, %cst_109 [2] : vector<2x8x8xf32> to vector<2x8xf32>
      %303 = vector.shape_cast %302 : vector<2x8xf32> to vector<2x8x1xf32>
      %304 = vector.broadcast %cst_16 : f32 to vector<2x8x1xf32>
      %305 = arith.divf %304, %303 : vector<2x8x1xf32>
      %306 = math.absf %305 : vector<2x8x1xf32>
      %cst_110 = arith.constant 0x7F800000 : f32
      %307 = vector.broadcast %cst_110 : f32 to vector<2x8x1xf32>
      %308 = arith.cmpf olt, %306, %307 : vector<2x8x1xf32>
      %cst_111 = arith.constant dense<true> : vector<2x8x1xi1>
      %309 = arith.xori %308, %cst_111 : vector<2x8x1xi1>
      %310 = math.absf %299 : vector<2x1x8xf32>
      %cst_112 = arith.constant 0x7F800000 : f32
      %311 = vector.broadcast %cst_112 : f32 to vector<2x1x8xf32>
      %312 = arith.cmpf olt, %310, %311 : vector<2x1x8xf32>
      %cst_113 = arith.constant dense<true> : vector<2x1x8xi1>
      %313 = arith.xori %312, %cst_113 : vector<2x1x8xi1>
      %314 = arith.extui %309 : vector<2x8x1xi1> to vector<2x8x1xi32>
      %315 = arith.sitofp %314 : vector<2x8x1xi32> to vector<2x8x1xf32>
      %cst_114 = arith.constant dense<0xFF800000> : vector<2x8xf32>
      %316 = vector.multi_reduction <maximumf>, %315, %cst_114 [2] : vector<2x8x1xf32> to vector<2x8xf32>
      %317 = vector.shape_cast %316 : vector<2x8xf32> to vector<1x2x8xf32>
      %cst_115 = arith.constant dense<0xFF800000> : vector<1xf32>
      %318 = vector.multi_reduction <maximumf>, %317, %cst_115 [1, 2] : vector<1x2x8xf32> to vector<1xf32>
      %319 = vector.shape_cast %318 : vector<1xf32> to vector<1x1x1xf32>
      %320 = vector.extract %319[0, 0, 0] : f32 from vector<1x1x1xf32>
      %321 = arith.extui %313 : vector<2x1x8xi1> to vector<2x1x8xi32>
      %322 = arith.sitofp %321 : vector<2x1x8xi32> to vector<2x1x8xf32>
      %cst_116 = arith.constant dense<0xFF800000> : vector<2x1xf32>
      %323 = vector.multi_reduction <maximumf>, %322, %cst_116 [2] : vector<2x1x8xf32> to vector<2x1xf32>
      %324 = vector.shape_cast %323 : vector<2x1xf32> to vector<1x2x1xf32>
      %cst_117 = arith.constant dense<0xFF800000> : vector<1xf32>
      %325 = vector.multi_reduction <maximumf>, %324, %cst_117 [1, 2] : vector<1x2x1xf32> to vector<1xf32>
      %326 = vector.shape_cast %325 : vector<1xf32> to vector<1x1x1xf32>
      %327 = vector.extract %326[0, 0, 0] : f32 from vector<1x1x1xf32>
      %328 = arith.maximumf %320, %327 : f32
      %cst_118 = arith.constant 0.000000e+00 : f32
      %329 = arith.cmpf ogt, %328, %cst_118 : f32
      %c0_i32_119 = arith.constant 0 : i32
      %330 = arith.cmpi eq, %293, %c0_i32_119 : i32
      %true_120 = arith.constant true
      %331 = arith.xori %329, %true_120 : i1
      %332 = arith.andi %330, %331 : i1
      %333 = arith.select %332, %305, %291 : vector<2x8x1xf32>
      %334 = arith.select %332, %299, %292 : vector<2x1x8xf32>
      %c1_i32_121 = arith.constant 1 : i32
      %335 = arith.select %329, %c1_i32_121, %293 : i32
      %c7_i32 = arith.constant 7 : i32
      %336 = vector.broadcast %333 : vector<2x8x1xf32> to vector<2x8x8xf32>
      %337 = arith.mulf %28, %336 : vector<2x8x8xf32>
      %cst_122 = arith.constant dense<0.000000e+00> : vector<2x8xf32>
      %338 = vector.multi_reduction <add>, %337, %cst_122 [1] : vector<2x8x8xf32> to vector<2x8xf32>
      %339 = vector.shape_cast %338 : vector<2x8xf32> to vector<2x1x8xf32>
      %340 = vector.broadcast %cst_16 : f32 to vector<2x1x8xf32>
      %341 = arith.divf %340, %339 : vector<2x1x8xf32>
      %342 = vector.broadcast %341 : vector<2x1x8xf32> to vector<2x8x8xf32>
      %343 = arith.mulf %28, %342 : vector<2x8x8xf32>
      %cst_123 = arith.constant dense<0.000000e+00> : vector<2x8xf32>
      %344 = vector.multi_reduction <add>, %343, %cst_123 [2] : vector<2x8x8xf32> to vector<2x8xf32>
      %345 = vector.shape_cast %344 : vector<2x8xf32> to vector<2x8x1xf32>
      %346 = vector.broadcast %cst_16 : f32 to vector<2x8x1xf32>
      %347 = arith.divf %346, %345 : vector<2x8x1xf32>
      %348 = math.absf %347 : vector<2x8x1xf32>
      %cst_124 = arith.constant 0x7F800000 : f32
      %349 = vector.broadcast %cst_124 : f32 to vector<2x8x1xf32>
      %350 = arith.cmpf olt, %348, %349 : vector<2x8x1xf32>
      %cst_125 = arith.constant dense<true> : vector<2x8x1xi1>
      %351 = arith.xori %350, %cst_125 : vector<2x8x1xi1>
      %352 = math.absf %341 : vector<2x1x8xf32>
      %cst_126 = arith.constant 0x7F800000 : f32
      %353 = vector.broadcast %cst_126 : f32 to vector<2x1x8xf32>
      %354 = arith.cmpf olt, %352, %353 : vector<2x1x8xf32>
      %cst_127 = arith.constant dense<true> : vector<2x1x8xi1>
      %355 = arith.xori %354, %cst_127 : vector<2x1x8xi1>
      %356 = arith.extui %351 : vector<2x8x1xi1> to vector<2x8x1xi32>
      %357 = arith.sitofp %356 : vector<2x8x1xi32> to vector<2x8x1xf32>
      %cst_128 = arith.constant dense<0xFF800000> : vector<2x8xf32>
      %358 = vector.multi_reduction <maximumf>, %357, %cst_128 [2] : vector<2x8x1xf32> to vector<2x8xf32>
      %359 = vector.shape_cast %358 : vector<2x8xf32> to vector<1x2x8xf32>
      %cst_129 = arith.constant dense<0xFF800000> : vector<1xf32>
      %360 = vector.multi_reduction <maximumf>, %359, %cst_129 [1, 2] : vector<1x2x8xf32> to vector<1xf32>
      %361 = vector.shape_cast %360 : vector<1xf32> to vector<1x1x1xf32>
      %362 = vector.extract %361[0, 0, 0] : f32 from vector<1x1x1xf32>
      %363 = arith.extui %355 : vector<2x1x8xi1> to vector<2x1x8xi32>
      %364 = arith.sitofp %363 : vector<2x1x8xi32> to vector<2x1x8xf32>
      %cst_130 = arith.constant dense<0xFF800000> : vector<2x1xf32>
      %365 = vector.multi_reduction <maximumf>, %364, %cst_130 [2] : vector<2x1x8xf32> to vector<2x1xf32>
      %366 = vector.shape_cast %365 : vector<2x1xf32> to vector<1x2x1xf32>
      %cst_131 = arith.constant dense<0xFF800000> : vector<1xf32>
      %367 = vector.multi_reduction <maximumf>, %366, %cst_131 [1, 2] : vector<1x2x1xf32> to vector<1xf32>
      %368 = vector.shape_cast %367 : vector<1xf32> to vector<1x1x1xf32>
      %369 = vector.extract %368[0, 0, 0] : f32 from vector<1x1x1xf32>
      %370 = arith.maximumf %362, %369 : f32
      %cst_132 = arith.constant 0.000000e+00 : f32
      %371 = arith.cmpf ogt, %370, %cst_132 : f32
      %c0_i32_133 = arith.constant 0 : i32
      %372 = arith.cmpi eq, %335, %c0_i32_133 : i32
      %true_134 = arith.constant true
      %373 = arith.xori %371, %true_134 : i1
      %374 = arith.andi %372, %373 : i1
      %375 = arith.select %374, %347, %333 : vector<2x8x1xf32>
      %376 = arith.select %374, %341, %334 : vector<2x1x8xf32>
      %c1_i32_135 = arith.constant 1 : i32
      %377 = arith.select %371, %c1_i32_135, %335 : i32
      %c8_i32 = arith.constant 8 : i32
      %378 = vector.broadcast %375 : vector<2x8x1xf32> to vector<2x8x8xf32>
      %379 = arith.mulf %28, %378 : vector<2x8x8xf32>
      %cst_136 = arith.constant dense<0.000000e+00> : vector<2x8xf32>
      %380 = vector.multi_reduction <add>, %379, %cst_136 [1] : vector<2x8x8xf32> to vector<2x8xf32>
      %381 = vector.shape_cast %380 : vector<2x8xf32> to vector<2x1x8xf32>
      %382 = vector.broadcast %cst_16 : f32 to vector<2x1x8xf32>
      %383 = arith.divf %382, %381 : vector<2x1x8xf32>
      %384 = vector.broadcast %383 : vector<2x1x8xf32> to vector<2x8x8xf32>
      %385 = arith.mulf %28, %384 : vector<2x8x8xf32>
      %cst_137 = arith.constant dense<0.000000e+00> : vector<2x8xf32>
      %386 = vector.multi_reduction <add>, %385, %cst_137 [2] : vector<2x8x8xf32> to vector<2x8xf32>
      %387 = vector.shape_cast %386 : vector<2x8xf32> to vector<2x8x1xf32>
      %388 = vector.broadcast %cst_16 : f32 to vector<2x8x1xf32>
      %389 = arith.divf %388, %387 : vector<2x8x1xf32>
      %390 = math.absf %389 : vector<2x8x1xf32>
      %cst_138 = arith.constant 0x7F800000 : f32
      %391 = vector.broadcast %cst_138 : f32 to vector<2x8x1xf32>
      %392 = arith.cmpf olt, %390, %391 : vector<2x8x1xf32>
      %cst_139 = arith.constant dense<true> : vector<2x8x1xi1>
      %393 = arith.xori %392, %cst_139 : vector<2x8x1xi1>
      %394 = math.absf %383 : vector<2x1x8xf32>
      %cst_140 = arith.constant 0x7F800000 : f32
      %395 = vector.broadcast %cst_140 : f32 to vector<2x1x8xf32>
      %396 = arith.cmpf olt, %394, %395 : vector<2x1x8xf32>
      %cst_141 = arith.constant dense<true> : vector<2x1x8xi1>
      %397 = arith.xori %396, %cst_141 : vector<2x1x8xi1>
      %398 = arith.extui %393 : vector<2x8x1xi1> to vector<2x8x1xi32>
      %399 = arith.sitofp %398 : vector<2x8x1xi32> to vector<2x8x1xf32>
      %cst_142 = arith.constant dense<0xFF800000> : vector<2x8xf32>
      %400 = vector.multi_reduction <maximumf>, %399, %cst_142 [2] : vector<2x8x1xf32> to vector<2x8xf32>
      %401 = vector.shape_cast %400 : vector<2x8xf32> to vector<1x2x8xf32>
      %cst_143 = arith.constant dense<0xFF800000> : vector<1xf32>
      %402 = vector.multi_reduction <maximumf>, %401, %cst_143 [1, 2] : vector<1x2x8xf32> to vector<1xf32>
      %403 = vector.shape_cast %402 : vector<1xf32> to vector<1x1x1xf32>
      %404 = vector.extract %403[0, 0, 0] : f32 from vector<1x1x1xf32>
      %405 = arith.extui %397 : vector<2x1x8xi1> to vector<2x1x8xi32>
      %406 = arith.sitofp %405 : vector<2x1x8xi32> to vector<2x1x8xf32>
      %cst_144 = arith.constant dense<0xFF800000> : vector<2x1xf32>
      %407 = vector.multi_reduction <maximumf>, %406, %cst_144 [2] : vector<2x1x8xf32> to vector<2x1xf32>
      %408 = vector.shape_cast %407 : vector<2x1xf32> to vector<1x2x1xf32>
      %cst_145 = arith.constant dense<0xFF800000> : vector<1xf32>
      %409 = vector.multi_reduction <maximumf>, %408, %cst_145 [1, 2] : vector<1x2x1xf32> to vector<1xf32>
      %410 = vector.shape_cast %409 : vector<1xf32> to vector<1x1x1xf32>
      %411 = vector.extract %410[0, 0, 0] : f32 from vector<1x1x1xf32>
      %412 = arith.maximumf %404, %411 : f32
      %cst_146 = arith.constant 0.000000e+00 : f32
      %413 = arith.cmpf ogt, %412, %cst_146 : f32
      %c0_i32_147 = arith.constant 0 : i32
      %414 = arith.cmpi eq, %377, %c0_i32_147 : i32
      %true_148 = arith.constant true
      %415 = arith.xori %413, %true_148 : i1
      %416 = arith.andi %414, %415 : i1
      %417 = arith.select %416, %389, %375 : vector<2x8x1xf32>
      %418 = arith.select %416, %383, %376 : vector<2x1x8xf32>
      %c1_i32_149 = arith.constant 1 : i32
      %419 = arith.select %413, %c1_i32_149, %377 : i32
      %c9_i32 = arith.constant 9 : i32
      %420 = vector.broadcast %417 : vector<2x8x1xf32> to vector<2x8x8xf32>
      %421 = arith.mulf %28, %420 : vector<2x8x8xf32>
      %cst_150 = arith.constant dense<0.000000e+00> : vector<2x8xf32>
      %422 = vector.multi_reduction <add>, %421, %cst_150 [1] : vector<2x8x8xf32> to vector<2x8xf32>
      %423 = vector.shape_cast %422 : vector<2x8xf32> to vector<2x1x8xf32>
      %424 = vector.broadcast %cst_16 : f32 to vector<2x1x8xf32>
      %425 = arith.divf %424, %423 : vector<2x1x8xf32>
      %426 = vector.broadcast %425 : vector<2x1x8xf32> to vector<2x8x8xf32>
      %427 = arith.mulf %28, %426 : vector<2x8x8xf32>
      %cst_151 = arith.constant dense<0.000000e+00> : vector<2x8xf32>
      %428 = vector.multi_reduction <add>, %427, %cst_151 [2] : vector<2x8x8xf32> to vector<2x8xf32>
      %429 = vector.shape_cast %428 : vector<2x8xf32> to vector<2x8x1xf32>
      %430 = vector.broadcast %cst_16 : f32 to vector<2x8x1xf32>
      %431 = arith.divf %430, %429 : vector<2x8x1xf32>
      %432 = math.absf %431 : vector<2x8x1xf32>
      %cst_152 = arith.constant 0x7F800000 : f32
      %433 = vector.broadcast %cst_152 : f32 to vector<2x8x1xf32>
      %434 = arith.cmpf olt, %432, %433 : vector<2x8x1xf32>
      %cst_153 = arith.constant dense<true> : vector<2x8x1xi1>
      %435 = arith.xori %434, %cst_153 : vector<2x8x1xi1>
      %436 = math.absf %425 : vector<2x1x8xf32>
      %cst_154 = arith.constant 0x7F800000 : f32
      %437 = vector.broadcast %cst_154 : f32 to vector<2x1x8xf32>
      %438 = arith.cmpf olt, %436, %437 : vector<2x1x8xf32>
      %cst_155 = arith.constant dense<true> : vector<2x1x8xi1>
      %439 = arith.xori %438, %cst_155 : vector<2x1x8xi1>
      %440 = arith.extui %435 : vector<2x8x1xi1> to vector<2x8x1xi32>
      %441 = arith.sitofp %440 : vector<2x8x1xi32> to vector<2x8x1xf32>
      %cst_156 = arith.constant dense<0xFF800000> : vector<2x8xf32>
      %442 = vector.multi_reduction <maximumf>, %441, %cst_156 [2] : vector<2x8x1xf32> to vector<2x8xf32>
      %443 = vector.shape_cast %442 : vector<2x8xf32> to vector<1x2x8xf32>
      %cst_157 = arith.constant dense<0xFF800000> : vector<1xf32>
      %444 = vector.multi_reduction <maximumf>, %443, %cst_157 [1, 2] : vector<1x2x8xf32> to vector<1xf32>
      %445 = vector.shape_cast %444 : vector<1xf32> to vector<1x1x1xf32>
      %446 = vector.extract %445[0, 0, 0] : f32 from vector<1x1x1xf32>
      %447 = arith.extui %439 : vector<2x1x8xi1> to vector<2x1x8xi32>
      %448 = arith.sitofp %447 : vector<2x1x8xi32> to vector<2x1x8xf32>
      %cst_158 = arith.constant dense<0xFF800000> : vector<2x1xf32>
      %449 = vector.multi_reduction <maximumf>, %448, %cst_158 [2] : vector<2x1x8xf32> to vector<2x1xf32>
      %450 = vector.shape_cast %449 : vector<2x1xf32> to vector<1x2x1xf32>
      %cst_159 = arith.constant dense<0xFF800000> : vector<1xf32>
      %451 = vector.multi_reduction <maximumf>, %450, %cst_159 [1, 2] : vector<1x2x1xf32> to vector<1xf32>
      %452 = vector.shape_cast %451 : vector<1xf32> to vector<1x1x1xf32>
      %453 = vector.extract %452[0, 0, 0] : f32 from vector<1x1x1xf32>
      %454 = arith.maximumf %446, %453 : f32
      %cst_160 = arith.constant 0.000000e+00 : f32
      %455 = arith.cmpf ogt, %454, %cst_160 : f32
      %c0_i32_161 = arith.constant 0 : i32
      %456 = arith.cmpi eq, %419, %c0_i32_161 : i32
      %true_162 = arith.constant true
      %457 = arith.xori %455, %true_162 : i1
      %458 = arith.andi %456, %457 : i1
      %459 = arith.select %458, %431, %417 : vector<2x8x1xf32>
      %460 = arith.select %458, %425, %418 : vector<2x1x8xf32>
      %c1_i32_163 = arith.constant 1 : i32
      %461 = arith.select %455, %c1_i32_163, %419 : i32
      %c10_i32 = arith.constant 10 : i32
      %462 = vector.broadcast %459 : vector<2x8x1xf32> to vector<2x8x8xf32>
      %463 = arith.mulf %462, %28 : vector<2x8x8xf32>
      %464 = vector.broadcast %460 : vector<2x1x8xf32> to vector<2x8x8xf32>
      %465 = arith.mulf %463, %464 : vector<2x8x8xf32>
      %466 = arith.subf %arg7, %465 : vector<2x8x8xf32>
      %467 = math.absf %466 : vector<2x8x8xf32>
      %cst_164 = arith.constant dense<0xFF800000> : vector<2x8xf32>
      %468 = vector.multi_reduction <maximumf>, %467, %cst_164 [2] : vector<2x8x8xf32> to vector<2x8xf32>
      %469 = vector.shape_cast %468 : vector<2x8xf32> to vector<1x2x8xf32>
      %cst_165 = arith.constant dense<0xFF800000> : vector<1xf32>
      %470 = vector.multi_reduction <maximumf>, %469, %cst_165 [1, 2] : vector<1x2x8xf32> to vector<1xf32>
      %471 = vector.shape_cast %470 : vector<1xf32> to vector<1x1x1xf32>
      %472 = vector.extract %471[0, 0, 0] : f32 from vector<1x1x1xf32>
      %cst_166 = arith.constant 9.99999974E-6 : f32
      %473 = arith.cmpf olt, %472, %cst_166 : f32
      %c0_i32_167 = arith.constant 0 : i32
      %474 = arith.cmpi eq, %461, %c0_i32_167 : i32
      %475 = arith.select %474, %465, %arg7 : vector<2x8x8xf32>
      %true_168 = arith.constant true
      %476 = arith.xori %474, %true_168 : i1
      %477 = arith.ori %476, %473 : i1
      %c1_i32_169 = arith.constant 1 : i32
      %478 = arith.select %477, %c1_i32_169, %arg8 : i32
      %c1_i32_170 = arith.constant 1 : i32
      %479 = arith.addi %arg4, %c1_i32_170 : i32
      scf.yield %479, %459, %460, %475, %478 : i32, vector<2x8x1xf32>, vector<2x1x8xf32>, vector<2x8x8xf32>, i32
    }
    %36 = arith.mulf %17, %35#3 : vector<2x8x8xf32>
    %cst_18 = arith.constant dense<0.000000e+00> : vector<2x8xf32>
    %37 = vector.multi_reduction <add>, %36, %cst_18 [2] : vector<2x8x8xf32> to vector<2x8xf32>
    %38 = vector.shape_cast %37 : vector<2x8xf32> to vector<2x8x1xf32>
    %cst_19 = arith.constant dense<0.000000e+00> : vector<2x1xf32>
    %39 = vector.multi_reduction <add>, %38, %cst_19 [1] : vector<2x8x1xf32> to vector<2x1xf32>
    %40 = vector.shape_cast %39 : vector<2x1xf32> to vector<2x1x1xf32>
    %c0_20 = arith.constant 0 : index
    %c0_21 = arith.constant 0 : index
    %c0_22 = arith.constant 0 : index
    %41 = vector.load %arg3[%c0_20, %c0_21, %c0_22] : memref<2x1x1xf32, #tpu.memory_space<vmem>>, vector<2x1x1xf32>
    tpu.vector_store %arg3[%c0_20, %c0_21, %c0_22], %40 {strides = array<i32>} : memref<2x1x1xf32, #tpu.memory_space<vmem>>, vector<2x1x1xf32>,
    return
  }
  func.func @transform_0(%arg0: i32) -> (i32, i32, i32) {
    %c0_i32 = arith.constant 0 : i32
    %c0_i32_0 = arith.constant 0 : i32
    %c0_i32_1 = arith.constant 0 : i32
    return %arg0, %c0_i32, %c0_i32_0 : i32, i32, i32
  }
  func.func @transform_1(%arg0: i32) -> (i32, i32, i32) {
    %c0_i32 = arith.constant 0 : i32
    %c0_i32_0 = arith.constant 0 : i32
    %c0_i32_1 = arith.constant 0 : i32
    return %arg0, %c0_i32, %c0_i32_0 : i32, i32, i32
  }
  func.func @transform_2(%arg0: i32) -> (i32, i32, i32) {
    %c0_i32 = arith.constant 0 : i32
    %c0_i32_0 = arith.constant 0 : i32
    %c0_i32_1 = arith.constant 0 : i32
    return %arg0, %c0_i32, %c0_i32_0 : i32, i32, i32
  }
}

</mosaic_0001>

<llo_original>
// kernel: tpu_custom_call.1
$region0: #{tpu_custom_call.1}
  #allocation0 [shape = 'u32[]', space=smem, size = 0x4, offset = 0x4, fixed_abs, tag = 'smem constant byte address 0x4 - core index']
  #allocation1 [shape = 'u32[72,128]{1,0:T(1,128)}', space=vmem, size = 0x9000, scoped, tag = 'internal scratch']
  %s0 = inlined_call_operand.hbm [shape: f32[2,8,32], index: 0, kind: input, shape index: {}]
  %s1 = inlined_call_operand.hbm [shape: f32[2,8,32], index: 1, kind: input, shape index: {}]
  %s2 = inlined_call_operand.vmem [shape: f32[2,1,1], index: 2, kind: output, shape index: {}]
  %s3 = sld [smem:[#allocation0]]
  $region33: #{tpu_custom_call.1} parent=0
    _
  %s5 = ssub.s32 1, %s3
  %s6 = scalar_select 0, %s5, %s3
  $region1: #{tpu_custom_call.1} parent=0
    #allocation2 [shape = 'u8[8192]{0}', space=vmem, size = 0x2000, scoped, tag = 'input window, operand 0, single buffered']
    #allocation3 [shape = 's32[1]{0}', space=sflag, size = 0x4, scoped, tag = 'scoped memory for tpu_custom_call.1']
    #allocation4 [shape = 'u8[8192]{0}', space=vmem, size = 0x2000, scoped, tag = 'input window, operand 1, single buffered']
    #allocation5 [shape = 's32[1]{0}', space=sflag, size = 0x4, scoped, tag = 'scoped memory for tpu_custom_call.1']
    %7 = vsyncpa [#allocation3], 0
    %8 = vsyncpa [#allocation5], 0
    // Predicated region
    $region2: #{tpu_custom_call.1} parent=1 // pred_check
      _
    $region3: #{tpu_custom_call.1} parent=1 // pred_check_branch
      %10 = sbr.rel (0) target = $region5
    $region4: #{tpu_custom_call.1} parent=1 // pred_region
      %12 = vsyncadd [#allocation3], 0
      %s13 = sshll.u32 %s0, 4
      %s14 = int_to_ptr.hbm [resolvable:$true] %s13
      %s15 = sshll.u32 [#allocation2], 4
      %s16 = int_to_ptr.vmem [resolvable:$true] %s15
      %21 = dma.hbm_to_vmem [thread:$0]  %s14, 256, %s16, [#allocation3], 128, 128, 8
    $region5: #{tpu_custom_call.1} parent=1 // pred_fallthru
      _
    // Predicated region
    $region6: #{tpu_custom_call.1} parent=1 // pred_check
      _
    $region7: #{tpu_custom_call.1} parent=1 // pred_check_branch
      %23 = sbr.rel (0) target = $region9
    $region8: #{tpu_custom_call.1} parent=1 // pred_region
      %25 = vsyncadd [#allocation5], 0
      %s26 = sshll.u32 %s1, 4
      %s27 = int_to_ptr.hbm [resolvable:$true] %s26
      %s28 = sshll.u32 [#allocation4], 4
      %s29 = int_to_ptr.vmem [resolvable:$true] %s28
      %34 = dma.hbm_to_vmem [thread:$0]  %s27, 256, %s29, [#allocation5], 128, 128, 8
    $region9: #{tpu_custom_call.1} parent=1 // pred_fallthru
      _
    // Predicated region
    $region10: #{tpu_custom_call.1} parent=1 // pred_check
      _
    $region11: #{tpu_custom_call.1} parent=1 // pred_check_branch
      %36 = sbr.rel (0) target = $region13
    $region12: #{tpu_custom_call.1} parent=1 // pred_region
      %38 = dma.done [#allocation3], 256
    $region13: #{tpu_custom_call.1} parent=1 // pred_fallthru
      _
    // Predicated region
    $region14: #{tpu_custom_call.1} parent=1 // pred_check
      _
    $region15: #{tpu_custom_call.1} parent=1 // pred_check_branch
      %40 = sbr.rel (0) target = $region17
    $region16: #{tpu_custom_call.1} parent=1 // pred_region
      %42 = dma.done [#allocation5], 256
    $region17: #{tpu_custom_call.1} parent=1 // pred_fallthru
      _
    %v43 = vld [vmem:[#allocation2] sm:$0xff]
    %v44 = vld [vmem:[#allocation2 + $0x8] sm:$0xff]
    %v45 = vld [vmem:[#allocation4] sm:$0xff]
    %v46 = vld [vmem:[#allocation4 + $0x8] sm:$0xff]
    %v47 = vmul.f32 %v43, %v43
    %v48 = vmul.f32 %v44, %v44
    %vm49 = vcmask 261120
    %v50 = vsel %vm49, %v47, 0.0
    %51 = vadd.xlane.f32.xlu0 %v50
    %v52 = vpop.xlane.xlu0 %51
    %v53 = vsel %vm49, %v48, 0.0
    %54 = vadd.xlane.f32.xlu0 %v53
    %v55 = vpop.xlane.xlu0 %54
    %v56 = vmul.f32 %v45, %v45
    %v57 = vmul.f32 %v46, %v46
    %v59 = vsel %vm49, 1.0, 0
    %v62 = vsel %vm49, %v56, 0
    %64 = vmatpush.xpose.msra.mxu0 0.0
    %65 = vmatpush.xpose.msra.mxu0 0.0
    %66 = vmatpush.xpose.msra.mxu0 0.0
    %67 = vmatpush.xpose.msra.mxu0 0.0
    %68 = vmatpush.xpose.msra.mxu0 0.0
    %69 = vmatpush.xpose.msra.mxu0 0.0
    %70 = vmatpush.xpose.msra.mxu0 0.0
    %71 = vmatpush.xpose.msra.mxu0 0.0
    %72 = vmatpush.xpose.msra.mxu0 0.0
    %73 = vmatpush.xpose.msra.mxu0 0.0
    %74 = vmatpush.xpose.msra.mxu0 0.0
    %75 = vmatpush.xpose.msra.mxu0 0.0
    %76 = vmatpush.xpose.msra.mxu0 0.0
    %77 = vmatpush.xpose.msra.mxu0 0.0
    %78 = vmatpush.xpose.msra.mxu0 0.0
    %79 = vmatpush.xpose.msra.mxu0 %v62
    %80 = vmatmul.f32.gmra.mxu0 %v59
    %v81 = vpop.f32.mrf.mxu0
    %v82 = vadd.f32 0.0, %v81
    %83 = vdwg.mxu0
    %v85 = vsel %vm49, %v57, 0
    %87 = vmatpush.xpose.msra.mxu0 0.0
    %88 = vmatpush.xpose.msra.mxu0 0.0
    %89 = vmatpush.xpose.msra.mxu0 0.0
    %90 = vmatpush.xpose.msra.mxu0 0.0
    %91 = vmatpush.xpose.msra.mxu0 0.0
    %92 = vmatpush.xpose.msra.mxu0 0.0
    %93 = vmatpush.xpose.msra.mxu0 0.0
    %94 = vmatpush.xpose.msra.mxu0 0.0
    %95 = vmatpush.xpose.msra.mxu0 0.0
    %96 = vmatpush.xpose.msra.mxu0 0.0
    %97 = vmatpush.xpose.msra.mxu0 0.0
    %98 = vmatpush.xpose.msra.mxu0 0.0
    %99 = vmatpush.xpose.msra.mxu0 0.0
    %100 = vmatpush.xpose.msra.mxu0 0.0
    %101 = vmatpush.xpose.msra.mxu0 0.0
    %102 = vmatpush.xpose.msra.mxu0 %v85
    %103 = vmatmul.f32.gmra.mxu0 %v59
    %v104 = vpop.f32.mrf.mxu0
    %v105 = vadd.f32 0.0, %v104
    %106 = vdwg.mxu0
    %v108 = vsel %vm49, %v43, 0
    %v111 = vsel %vm49, %v45, 0
    %113 = vmatpush.xpose.msra.mxu0 0.0
    %114 = vmatpush.xpose.msra.mxu0 0.0
    %115 = vmatpush.xpose.msra.mxu0 0.0
    %116 = vmatpush.xpose.msra.mxu0 0.0
    %117 = vmatpush.xpose.msra.mxu0 0.0
    %118 = vmatpush.xpose.msra.mxu0 0.0
    %119 = vmatpush.xpose.msra.mxu0 0.0
    %120 = vmatpush.xpose.msra.mxu0 0.0
    %121 = vmatpush.xpose.msra.mxu0 0.0
    %122 = vmatpush.xpose.msra.mxu0 0.0
    %123 = vmatpush.xpose.msra.mxu0 0.0
    %124 = vmatpush.xpose.msra.mxu0 0.0
    %125 = vmatpush.xpose.msra.mxu0 0.0
    %126 = vmatpush.xpose.msra.mxu0 0.0
    %127 = vmatpush.xpose.msra.mxu0 0.0
    %128 = vmatpush.xpose.msra.mxu0 %v111
    %129 = vmatmul.f32.gmra.mxu0 %v108
    %v130 = vpop.f32.mrf.mxu0
    %v131 = vadd.f32 0.0, %v130
    %132 = vdwg.mxu0
    %v134 = vsel %vm49, %v44, 0
    %v137 = vsel %vm49, %v46, 0
    %139 = vmatpush.xpose.msra.mxu0 0.0
    %140 = vmatpush.xpose.msra.mxu0 0.0
    %141 = vmatpush.xpose.msra.mxu0 0.0
    %142 = vmatpush.xpose.msra.mxu0 0.0
    %143 = vmatpush.xpose.msra.mxu0 0.0
    %144 = vmatpush.xpose.msra.mxu0 0.0
    %145 = vmatpush.xpose.msra.mxu0 0.0
    %146 = vmatpush.xpose.msra.mxu0 0.0
    %147 = vmatpush.xpose.msra.mxu0 0.0
    %148 = vmatpush.xpose.msra.mxu0 0.0
    %149 = vmatpush.xpose.msra.mxu0 0.0
    %150 = vmatpush.xpose.msra.mxu0 0.0
    %151 = vmatpush.xpose.msra.mxu0 0.0
    %152 = vmatpush.xpose.msra.mxu0 0.0
    %153 = vmatpush.xpose.msra.mxu0 0.0
    %154 = vmatpush.xpose.msra.mxu0 %v137
    %155 = vmatmul.f32.gmra.mxu0 %v134
    %v156 = vpop.f32.mrf.mxu0
    %v157 = vadd.f32 0.0, %v156
    %158 = vdwg.mxu0
    %v159 = vperm.slane %v82, 0
    %v160 = vperm.slane %v105, 0
    %v161 = vadd.f32 %v52, %v159
    %v162 = vadd.f32 %v55, %v160
    %v163 = vmul.f32 %v131, 2.0
    %v164 = vmul.f32 %v157, 2.0
    %v165 = vsub.f32 %v161, %v163
    %v166 = vsub.f32 %v162, %v164
    %v167 = vmax.f32 %v165, 0.0
    %v168 = vmax.f32 %v166, 0.0
    %v169 = vrsqrt.pop %v167
    %v170 = vmul.f32 %v169, %v167
    %v171 = vmul.f32 %v170, %v169
    %v172 = vmul.f32 0.5, %v171
    %v173 = vsub.f32 1.5, %v172
    %v174 = vmul.f32 %v169, %v173
    %v175 = vmul.f32 %v167, %v174
    %vm176 = vcmp.eq.f32.partialorder %v167, inf
    %v177 = vsel %vm176, %v167, %v175
    %vm178 = vcmp.eq.f32.partialorder %v167, 0.0
    %v179 = vand.u32 %v167, 2147483648
    %v180 = vsel %vm178, %v179, %v177
    %v181 = vrsqrt.pop %v168
    %v182 = vmul.f32 %v181, %v168
    %v183 = vmul.f32 %v182, %v181
    %v184 = vmul.f32 0.5, %v183
    %v185 = vsub.f32 1.5, %v184
    %v186 = vmul.f32 %v181, %v185
    %v187 = vmul.f32 %v168, %v186
    %vm188 = vcmp.eq.f32.partialorder %v168, inf
    %v189 = vsel %vm188, %v168, %v187
    %vm190 = vcmp.eq.f32.partialorder %v168, 0.0
    %v191 = vand.u32 %v168, 2147483648
    %v192 = vsel %vm190, %v191, %v189
    %vm193 = vcmask 64512
    %v194 = vsel %vm193, %v180, -inf
    %195 = vmax.xlane.f32.xlu0 %v194
    %v196 = vpop.xlane.xlu0 %195
    %v197 = vsel %vm193, %v192, -inf
    %198 = vmax.xlane.f32.xlu0 %v197
    %v199 = vpop.xlane.xlu0 %198
    %v200 = vrot.slane %v196, 4
    %v201 = vmax.f32 %v196, %v200
    %v202 = vrot.slane %v201, 2
    %v203 = vmax.f32 %v201, %v202
    %v204 = vrot.slane %v203, 1
    %v205 = vmax.f32 %v203, %v204
    %v206 = vrot.slane %v199, 4
    %v207 = vmax.f32 %v199, %v206
    %v208 = vrot.slane %v207, 2
    %v209 = vmax.f32 %v207, %v208
    %v210 = vrot.slane %v209, 1
    %v211 = vmax.f32 %v209, %v210
    %v212 = vmax.f32 %v205, 1e-30
    %v213 = vmax.f32 %v211, 1e-30
    %v214 = vrcp.pop %v212
    %v215 = vmul.f32 %v212, %v214
    %v216 = vsub.f32 1.0, %v215
    %v217 = vmul.f32 %v214, %v216
    %v218 = vadd.f32 %v214, %v217
    %vm219 = vweird.f32 %v212
    %vm220 = vweird.f32 %v214
    %vm221 = vmor %vm219, %vm220
    %v222 = vsel %vm221, %v214, %v218
    %v223 = vand.u32 2147483647, %v212
    %vm224 = vcmp.eq.f32.partialorder %v223, 8.507059e+37
    %v225 = vand.u32 %v212, 2147483648
    %v226 = vor.u32 1.1754944e-38, %v225
    %v227 = vsel %vm224, %v226, %v222
    %v228 = vmul.f32 -100.0, %v227
    %v229 = vrcp.pop %v213
    %v230 = vmul.f32 %v213, %v229
    %v231 = vsub.f32 1.0, %v230
    %v232 = vmul.f32 %v229, %v231
    %v233 = vadd.f32 %v229, %v232
    %vm234 = vweird.f32 %v213
    %vm235 = vweird.f32 %v229
    %vm236 = vmor %vm234, %vm235
    %v237 = vsel %vm236, %v229, %v233
    %v238 = vand.u32 2147483647, %v213
    %vm239 = vcmp.eq.f32.partialorder %v238, 8.507059e+37
    %v240 = vand.u32 %v213, 2147483648
    %v241 = vor.u32 1.1754944e-38, %v240
    %v242 = vsel %vm239, %v241, %v237
    %v243 = vmul.f32 -100.0, %v242
    %v244 = vmul.f32 %v180, %v228
    %v245 = vmul.f32 %v192, %v243
    %v246 = vmul.f32 %v244, 1.442695
    %v247 = vpow.pop %v246
    %v248 = vmul.f32 %v245, 1.442695
    %v249 = vpow.pop %v248
    %v250 = vmul.f32 %v247, 0.125
    %v251 = vmul.f32 %v249, 0.125
    %v252 = vmul.f32 %v250, 0.125
    %v253 = vmul.f32 %v251, 0.125
    // While loop
    $region18: #{tpu_custom_call.1} parent=1 // loop_pre_header
      _
    $region19: #{tpu_custom_call.1} parent=1 // loop_header
      %s255 = sphi 0, %s1636
      %v256 = vphi 0.125, %v1599
      %v257 = vphi 0.125, %v1600
      %v258 = vphi 0.125, %v1601
      %v259 = vphi 0.125, %v1602
      %v260 = vphi %v252, %v1631
      %v261 = vphi %v253, %v1632
      %s262 = sphi 0, %s1635
      %p263 = scmp.lt.s32.totalorder %s255, 10
      %p264 = scmp.eq.s32.totalorder %s262, 0
      %p265 = pnand %p263, %p264
      %p266 = pneg %p265
    $region20: #{tpu_custom_call.1} parent=1 // loop_header_branch
      %268 = sbr.rel (%p265) target = $region24
    $region21: #{tpu_custom_call.1} parent=1 // loop_body
      %v269 = vmul.f32 %v247, %v256
      %v270 = vmul.f32 %v249, %v257
      %v271 = vsel %vm193, %v269, 0.0
      %v272 = vrot.slane %v271, 4
      %v273 = vadd.f32 %v271, %v272
      %v274 = vrot.slane %v273, 2
      %v275 = vadd.f32 %v273, %v274
      %v276 = vrot.slane %v275, 1
      %v277 = vadd.f32 %v275, %v276
      %v278 = vsel %vm193, %v270, 0.0
      %v279 = vrot.slane %v278, 4
      %v280 = vadd.f32 %v278, %v279
      %v281 = vrot.slane %v280, 2
      %v282 = vadd.f32 %v280, %v281
      %v283 = vrot.slane %v282, 1
      %v284 = vadd.f32 %v282, %v283
      %v285 = vrcp.pop %v277
      %v286 = vmul.f32 %v277, %v285
      %v287 = vsub.f32 1.0, %v286
      %v288 = vmul.f32 %v285, %v287
      %v289 = vadd.f32 %v285, %v288
      %vm290 = vweird.f32 %v277
      %vm291 = vweird.f32 %v285
      %vm292 = vmor %vm290, %vm291
      %v293 = vsel %vm292, %v285, %v289
      %v294 = vand.u32 2147483647, %v277
      %vm295 = vcmp.eq.f32.partialorder %v294, 8.507059e+37
      %v296 = vand.u32 %v277, 2147483648
      %v297 = vor.u32 1.1754944e-38, %v296
      %v298 = vsel %vm295, %v297, %v293
      %v299 = vmul.f32 0.125, %v298
      %v300 = vrcp.pop %v284
      %v301 = vmul.f32 %v284, %v300
      %v302 = vsub.f32 1.0, %v301
      %v303 = vmul.f32 %v300, %v302
      %v304 = vadd.f32 %v300, %v303
      %vm305 = vweird.f32 %v284
      %vm306 = vweird.f32 %v300
      %vm307 = vmor %vm305, %vm306
      %v308 = vsel %vm307, %v300, %v304
      %v309 = vand.u32 2147483647, %v284
      %vm310 = vcmp.eq.f32.partialorder %v309, 8.507059e+37
      %v311 = vand.u32 %v284, 2147483648
      %v312 = vor.u32 1.1754944e-38, %v311
      %v313 = vsel %vm310, %v312, %v308
      %v314 = vmul.f32 0.125, %v313
      %v315 = vmul.f32 %v247, %v299
      %v316 = vmul.f32 %v249, %v314
      %v317 = vsel %vm193, %v315, 0.0
      %318 = vadd.xlane.f32.xlu0 %v317
      %v319 = vpop.xlane.xlu0 %318
      %v320 = vsel %vm193, %v316, 0.0
      %321 = vadd.xlane.f32.xlu0 %v320
      %v322 = vpop.xlane.xlu0 %321
      %v323 = vrcp.pop %v319
      %v324 = vmul.f32 %v319, %v323
      %v325 = vsub.f32 1.0, %v324
      %v326 = vmul.f32 %v323, %v325
      %v327 = vadd.f32 %v323, %v326
      %vm328 = vweird.f32 %v319
      %vm329 = vweird.f32 %v323
      %vm330 = vmor %vm328, %vm329
      %v331 = vsel %vm330, %v323, %v327
      %v332 = vand.u32 2147483647, %v319
      %vm333 = vcmp.eq.f32.partialorder %v332, 8.507059e+37
      %v334 = vand.u32 %v319, 2147483648
      %v335 = vor.u32 1.1754944e-38, %v334
      %v336 = vsel %vm333, %v335, %v331
      %v337 = vmul.f32 0.125, %v336
      %v338 = vrcp.pop %v322
      %v339 = vmul.f32 %v322, %v338
      %v340 = vsub.f32 1.0, %v339
      %v341 = vmul.f32 %v338, %v340
      %v342 = vadd.f32 %v338, %v341
      %vm343 = vweird.f32 %v322
      %vm344 = vweird.f32 %v338
      %vm345 = vmor %vm343, %vm344
      %v346 = vsel %vm345, %v338, %v342
      %v347 = vand.u32 2147483647, %v322
      %vm348 = vcmp.eq.f32.partialorder %v347, 8.507059e+37
      %v349 = vand.u32 %v322, 2147483648
      %v350 = vor.u32 1.1754944e-38, %v349
      %v351 = vsel %vm348, %v350, %v346
      %v352 = vmul.f32 0.125, %v351
      %v353 = vand.u32 2147483647, %v337
      %v354 = vand.u32 2147483647, %v352
      %vm355 = vcmp.lt.f32.partialorder %v353, inf
      %vm356 = vcmp.lt.f32.partialorder %v354, inf
      %vm357 = vmxor %vm355, 1
      %vm358 = vmxor %vm356, 1
      %v359 = vand.u32 2147483647, %v299
      %v360 = vand.u32 2147483647, %v314
      %vm361 = vcmp.lt.f32.partialorder %v359, inf
      %vm362 = vcmp.lt.f32.partialorder %v360, inf
      %vm363 = vmxor %vm361, 1
      %vm364 = vmxor %vm362, 1
      %v365 = vsel %vm357, 1, 0
      %v366 = vsel %vm358, 1, 0
      %v367 = vcvt.s32.f32 %v365
      %v368 = vcvt.s32.f32 %v366
      %v369 = vmax.f32 %v367, %v368
      %v370 = vrot.slane %v369, 4
      %v371 = vmax.f32 %v369, %v370
      %v372 = vrot.slane %v371, 2
      %v373 = vmax.f32 %v371, %v372
      %v374 = vrot.slane %v373, 1
      %v375 = vmax.f32 %v373, %v374
      %s376 = vtos %v375
      %v377 = vsel %vm363, 1, 0
      %v378 = vsel %vm364, 1, 0
      %v379 = vcvt.s32.f32 %v377
      %v380 = vcvt.s32.f32 %v378
      %v381 = vsel %vm193, %v379, -inf
      %382 = vmax.xlane.f32.xlu0 %v381
      %v383 = vpop.xlane.xlu0 %382
      %v384 = vsel %vm193, %v380, -inf
      %385 = vmax.xlane.f32.xlu0 %v384
      %v386 = vpop.xlane.xlu0 %385
      %v387 = vmax.f32 %v383, %v386
      %s388 = vtos %v387
      %s389 = smax.f32 %s376, %s388
      %p390 = scmp.gt.f32.partialorder %s389, 0.0
      %s391 = scalar_select %p390, 1, 0
      %v392 = vstv %s391
      %vm393 = vcmp.eq.s32.totalorder %v392, 1
      %v394 = vsel %vm393, %v256, %v337
      %v395 = vsel %vm393, %v257, %v352
      %v396 = vsel %vm393, %v258, %v299
      %v397 = vsel %vm393, %v259, %v314
      %v398 = vmul.f32 %v247, %v394
      %v399 = vmul.f32 %v249, %v395
      %v400 = vsel %vm193, %v398, 0.0
      %v401 = vrot.slane %v400, 4
      %v402 = vadd.f32 %v400, %v401
      %v403 = vrot.slane %v402, 2
      %v404 = vadd.f32 %v402, %v403
      %v405 = vrot.slane %v404, 1
      %v406 = vadd.f32 %v404, %v405
      %v407 = vsel %vm193, %v399, 0.0
      %v408 = vrot.slane %v407, 4
      %v409 = vadd.f32 %v407, %v408
      %v410 = vrot.slane %v409, 2
      %v411 = vadd.f32 %v409, %v410
      %v412 = vrot.slane %v411, 1
      %v413 = vadd.f32 %v411, %v412
      %v414 = vrcp.pop %v406
      %v415 = vmul.f32 %v406, %v414
      %v416 = vsub.f32 1.0, %v415
      %v417 = vmul.f32 %v414, %v416
      %v418 = vadd.f32 %v414, %v417
      %vm419 = vweird.f32 %v406
      %vm420 = vweird.f32 %v414
      %vm421 = vmor %vm419, %vm420
      %v422 = vsel %vm421, %v414, %v418
      %v423 = vand.u32 2147483647, %v406
      %vm424 = vcmp.eq.f32.partialorder %v423, 8.507059e+37
      %v425 = vand.u32 %v406, 2147483648
      %v426 = vor.u32 1.1754944e-38, %v425
      %v427 = vsel %vm424, %v426, %v422
      %v428 = vmul.f32 0.125, %v427
      %v429 = vrcp.pop %v413
      %v430 = vmul.f32 %v413, %v429
      %v431 = vsub.f32 1.0, %v430
      %v432 = vmul.f32 %v429, %v431
      %v433 = vadd.f32 %v429, %v432
      %vm434 = vweird.f32 %v413
      %vm435 = vweird.f32 %v429
      %vm436 = vmor %vm434, %vm435
      %v437 = vsel %vm436, %v429, %v433
      %v438 = vand.u32 2147483647, %v413
      %vm439 = vcmp.eq.f32.partialorder %v438, 8.507059e+37
      %v440 = vand.u32 %v413, 2147483648
      %v441 = vor.u32 1.1754944e-38, %v440
      %v442 = vsel %vm439, %v441, %v437
      %v443 = vmul.f32 0.125, %v442
      %v444 = vmul.f32 %v247, %v428
      %v445 = vmul.f32 %v249, %v443
      %v446 = vsel %vm193, %v444, 0.0
      %447 = vadd.xlane.f32.xlu0 %v446
      %v448 = vpop.xlane.xlu0 %447
      %v449 = vsel %vm193, %v445, 0.0
      %450 = vadd.xlane.f32.xlu0 %v449
      %v451 = vpop.xlane.xlu0 %450
      %v452 = vrcp.pop %v448
      %v453 = vmul.f32 %v448, %v452
      %v454 = vsub.f32 1.0, %v453
      %v455 = vmul.f32 %v452, %v454
      %v456 = vadd.f32 %v452, %v455
      %vm457 = vweird.f32 %v448
      %vm458 = vweird.f32 %v452
      %vm459 = vmor %vm457, %vm458
      %v460 = vsel %vm459, %v452, %v456
      %v461 = vand.u32 2147483647, %v448
      %vm462 = vcmp.eq.f32.partialorder %v461, 8.507059e+37
      %v463 = vand.u32 %v448, 2147483648
      %v464 = vor.u32 1.1754944e-38, %v463
      %v465 = vsel %vm462, %v464, %v460
      %v466 = vmul.f32 0.125, %v465
      %v467 = vrcp.pop %v451
      %v468 = vmul.f32 %v451, %v467
      %v469 = vsub.f32 1.0, %v468
      %v470 = vmul.f32 %v467, %v469
      %v471 = vadd.f32 %v467, %v470
      %vm472 = vweird.f32 %v451
      %vm473 = vweird.f32 %v467
      %vm474 = vmor %vm472, %vm473
      %v475 = vsel %vm474, %v467, %v471
      %v476 = vand.u32 2147483647, %v451
      %vm477 = vcmp.eq.f32.partialorder %v476, 8.507059e+37
      %v478 = vand.u32 %v451, 2147483648
      %v479 = vor.u32 1.1754944e-38, %v478
      %v480 = vsel %vm477, %v479, %v475
      %v481 = vmul.f32 0.125, %v480
      %v482 = vand.u32 2147483647, %v466
      %v483 = vand.u32 2147483647, %v481
      %vm484 = vcmp.lt.f32.partialorder %v482, inf
      %vm485 = vcmp.lt.f32.partialorder %v483, inf
      %vm486 = vmxor %vm484, 1
      %vm487 = vmxor %vm485, 1
      %v488 = vand.u32 2147483647, %v428
      %v489 = vand.u32 2147483647, %v443
      %vm490 = vcmp.lt.f32.partialorder %v488, inf
      %vm491 = vcmp.lt.f32.partialorder %v489, inf
      %vm492 = vmxor %vm490, 1
      %vm493 = vmxor %vm491, 1
      %v494 = vsel %vm486, 1, 0
      %v495 = vsel %vm487, 1, 0
      %v496 = vcvt.s32.f32 %v494
      %v497 = vcvt.s32.f32 %v495
      %v498 = vmax.f32 %v496, %v497
      %v499 = vrot.slane %v498, 4
      %v500 = vmax.f32 %v498, %v499
      %v501 = vrot.slane %v500, 2
      %v502 = vmax.f32 %v500, %v501
      %v503 = vrot.slane %v502, 1
      %v504 = vmax.f32 %v502, %v503
      %s505 = vtos %v504
      %v506 = vsel %vm492, 1, 0
      %v507 = vsel %vm493, 1, 0
      %v508 = vcvt.s32.f32 %v506
      %v509 = vcvt.s32.f32 %v507
      %v510 = vsel %vm193, %v508, -inf
      %511 = vmax.xlane.f32.xlu0 %v510
      %v512 = vpop.xlane.xlu0 %511
      %v513 = vsel %vm193, %v509, -inf
      %514 = vmax.xlane.f32.xlu0 %v513
      %v515 = vpop.xlane.xlu0 %514
      %v516 = vmax.f32 %v512, %v515
      %s517 = vtos %v516
      %s518 = smax.f32 %s505, %s517
      %p519 = scmp.gt.f32.partialorder %s518, 0.0
      %p520 = scmp.eq.s32.totalorder %s391, 0
      %p521 = pneg %p519
      %p522 = pnand %p520, %p521
      %p523 = pneg %p522
      %s524 = scalar_select %p523, 1, 0
      %v525 = vstv %s524
      %vm526 = vcmp.eq.s32.totalorder %v525, 1
      %v527 = vsel %vm526, %v466, %v394
      %v528 = vsel %vm526, %v481, %v395
      %v529 = vsel %vm526, %v428, %v396
      %v530 = vsel %vm526, %v443, %v397
      %s531 = scalar_select %p519, 1, %s391
      %v532 = vmul.f32 %v247, %v527
      %v533 = vmul.f32 %v249, %v528
      %v534 = vsel %vm193, %v532, 0.0
      %v535 = vrot.slane %v534, 4
      %v536 = vadd.f32 %v534, %v535
      %v537 = vrot.slane %v536, 2
      %v538 = vadd.f32 %v536, %v537
      %v539 = vrot.slane %v538, 1
      %v540 = vadd.f32 %v538, %v539
      %v541 = vsel %vm193, %v533, 0.0
      %v542 = vrot.slane %v541, 4
      %v543 = vadd.f32 %v541, %v542
      %v544 = vrot.slane %v543, 2
      %v545 = vadd.f32 %v543, %v544
      %v546 = vrot.slane %v545, 1
      %v547 = vadd.f32 %v545, %v546
      %v548 = vrcp.pop %v540
      %v549 = vmul.f32 %v540, %v548
      %v550 = vsub.f32 1.0, %v549
      %v551 = vmul.f32 %v548, %v550
      %v552 = vadd.f32 %v548, %v551
      %vm553 = vweird.f32 %v540
      %vm554 = vweird.f32 %v548
      %vm555 = vmor %vm553, %vm554
      %v556 = vsel %vm555, %v548, %v552
      %v557 = vand.u32 2147483647, %v540
      %vm558 = vcmp.eq.f32.partialorder %v557, 8.507059e+37
      %v559 = vand.u32 %v540, 2147483648
      %v560 = vor.u32 1.1754944e-38, %v559
      %v561 = vsel %vm558, %v560, %v556
      %v562 = vmul.f32 0.125, %v561
      %v563 = vrcp.pop %v547
      %v564 = vmul.f32 %v547, %v563
      %v565 = vsub.f32 1.0, %v564
      %v566 = vmul.f32 %v563, %v565
      %v567 = vadd.f32 %v563, %v566
      %vm568 = vweird.f32 %v547
      %vm569 = vweird.f32 %v563
      %vm570 = vmor %vm568, %vm569
      %v571 = vsel %vm570, %v563, %v567
      %v572 = vand.u32 2147483647, %v547
      %vm573 = vcmp.eq.f32.partialorder %v572, 8.507059e+37
      %v574 = vand.u32 %v547, 2147483648
      %v575 = vor.u32 1.1754944e-38, %v574
      %v576 = vsel %vm573, %v575, %v571
      %v577 = vmul.f32 0.125, %v576
      %v578 = vmul.f32 %v247, %v562
      %v579 = vmul.f32 %v249, %v577
      %v580 = vsel %vm193, %v578, 0.0
      %581 = vadd.xlane.f32.xlu0 %v580
      %v582 = vpop.xlane.xlu0 %581
      %v583 = vsel %vm193, %v579, 0.0
      %584 = vadd.xlane.f32.xlu0 %v583
      %v585 = vpop.xlane.xlu0 %584
      %v586 = vrcp.pop %v582
      %v587 = vmul.f32 %v582, %v586
      %v588 = vsub.f32 1.0, %v587
      %v589 = vmul.f32 %v586, %v588
      %v590 = vadd.f32 %v586, %v589
      %vm591 = vweird.f32 %v582
      %vm592 = vweird.f32 %v586
      %vm593 = vmor %vm591, %vm592
      %v594 = vsel %vm593, %v586, %v590
      %v595 = vand.u32 2147483647, %v582
      %vm596 = vcmp.eq.f32.partialorder %v595, 8.507059e+37
      %v597 = vand.u32 %v582, 2147483648
      %v598 = vor.u32 1.1754944e-38, %v597
      %v599 = vsel %vm596, %v598, %v594
      %v600 = vmul.f32 0.125, %v599
      %v601 = vrcp.pop %v585
      %v602 = vmul.f32 %v585, %v601
      %v603 = vsub.f32 1.0, %v602
      %v604 = vmul.f32 %v601, %v603
      %v605 = vadd.f32 %v601, %v604
      %vm606 = vweird.f32 %v585
      %vm607 = vweird.f32 %v601
      %vm608 = vmor %vm606, %vm607
      %v609 = vsel %vm608, %v601, %v605
      %v610 = vand.u32 2147483647, %v585
      %vm611 = vcmp.eq.f32.partialorder %v610, 8.507059e+37
      %v612 = vand.u32 %v585, 2147483648
      %v613 = vor.u32 1.1754944e-38, %v612
      %v614 = vsel %vm611, %v613, %v609
      %v615 = vmul.f32 0.125, %v614
      %v616 = vand.u32 2147483647, %v600
      %v617 = vand.u32 2147483647, %v615
      %vm618 = vcmp.lt.f32.partialorder %v616, inf
      %vm619 = vcmp.lt.f32.partialorder %v617, inf
      %vm620 = vmxor %vm618, 1
      %vm621 = vmxor %vm619, 1
      %v622 = vand.u32 2147483647, %v562
      %v623 = vand.u32 2147483647, %v577
      %vm624 = vcmp.lt.f32.partialorder %v622, inf
      %vm625 = vcmp.lt.f32.partialorder %v623, inf
      %vm626 = vmxor %vm624, 1
      %vm627 = vmxor %vm625, 1
      %v628 = vsel %vm620, 1, 0
      %v629 = vsel %vm621, 1, 0
      %v630 = vcvt.s32.f32 %v628
      %v631 = vcvt.s32.f32 %v629
      %v632 = vmax.f32 %v630, %v631
      %v633 = vrot.slane %v632, 4
      %v634 = vmax.f32 %v632, %v633
      %v635 = vrot.slane %v634, 2
      %v636 = vmax.f32 %v634, %v635
      %v637 = vrot.slane %v636, 1
      %v638 = vmax.f32 %v636, %v637
      %s639 = vtos %v638
      %v640 = vsel %vm626, 1, 0
      %v641 = vsel %vm627, 1, 0
      %v642 = vcvt.s32.f32 %v640
      %v643 = vcvt.s32.f32 %v641
      %v644 = vsel %vm193, %v642, -inf
      %645 = vmax.xlane.f32.xlu0 %v644
      %v646 = vpop.xlane.xlu0 %645
      %v647 = vsel %vm193, %v643, -inf
      %648 = vmax.xlane.f32.xlu0 %v647
      %v649 = vpop.xlane.xlu0 %648
      %v650 = vmax.f32 %v646, %v649
      %s651 = vtos %v650
      %s652 = smax.f32 %s639, %s651
      %p653 = scmp.gt.f32.partialorder %s652, 0.0
      %p654 = scmp.eq.s32.totalorder %s531, 0
      %p655 = pneg %p653
      %p656 = pnand %p654, %p655
      %p657 = pneg %p656
      %s658 = scalar_select %p657, 1, 0
      %v659 = vstv %s658
      %vm660 = vcmp.eq.s32.totalorder %v659, 1
      %v661 = vsel %vm660, %v600, %v527
      %v662 = vsel %vm660, %v615, %v528
      %v663 = vsel %vm660, %v562, %v529
      %v664 = vsel %vm660, %v577, %v530
      %s665 = scalar_select %p653, 1, %s531
      %v666 = vmul.f32 %v247, %v661
      %v667 = vmul.f32 %v249, %v662
      %v668 = vsel %vm193, %v666, 0.0
      %v669 = vrot.slane %v668, 4
      %v670 = vadd.f32 %v668, %v669
      %v671 = vrot.slane %v670, 2
      %v672 = vadd.f32 %v670, %v671
      %v673 = vrot.slane %v672, 1
      %v674 = vadd.f32 %v672, %v673
      %v675 = vsel %vm193, %v667, 0.0
      %v676 = vrot.slane %v675, 4
      %v677 = vadd.f32 %v675, %v676
      %v678 = vrot.slane %v677, 2
      %v679 = vadd.f32 %v677, %v678
      %v680 = vrot.slane %v679, 1
      %v681 = vadd.f32 %v679, %v680
      %v682 = vrcp.pop %v674
      %v683 = vmul.f32 %v674, %v682
      %v684 = vsub.f32 1.0, %v683
      %v685 = vmul.f32 %v682, %v684
      %v686 = vadd.f32 %v682, %v685
      %vm687 = vweird.f32 %v674
      %vm688 = vweird.f32 %v682
      %vm689 = vmor %vm687, %vm688
      %v690 = vsel %vm689, %v682, %v686
      %v691 = vand.u32 2147483647, %v674
      %vm692 = vcmp.eq.f32.partialorder %v691, 8.507059e+37
      %v693 = vand.u32 %v674, 2147483648
      %v694 = vor.u32 1.1754944e-38, %v693
      %v695 = vsel %vm692, %v694, %v690
      %v696 = vmul.f32 0.125, %v695
      %v697 = vrcp.pop %v681
      %v698 = vmul.f32 %v681, %v697
      %v699 = vsub.f32 1.0, %v698
      %v700 = vmul.f32 %v697, %v699
      %v701 = vadd.f32 %v697, %v700
      %vm702 = vweird.f32 %v681
      %vm703 = vweird.f32 %v697
      %vm704 = vmor %vm702, %vm703
      %v705 = vsel %vm704, %v697, %v701
      %v706 = vand.u32 2147483647, %v681
      %vm707 = vcmp.eq.f32.partialorder %v706, 8.507059e+37
      %v708 = vand.u32 %v681, 2147483648
      %v709 = vor.u32 1.1754944e-38, %v708
      %v710 = vsel %vm707, %v709, %v705
      %v711 = vmul.f32 0.125, %v710
      %v712 = vmul.f32 %v247, %v696
      %v713 = vmul.f32 %v249, %v711
      %v714 = vsel %vm193, %v712, 0.0
      %715 = vadd.xlane.f32.xlu0 %v714
      %v716 = vpop.xlane.xlu0 %715
      %v717 = vsel %vm193, %v713, 0.0
      %718 = vadd.xlane.f32.xlu0 %v717
      %v719 = vpop.xlane.xlu0 %718
      %v720 = vrcp.pop %v716
      %v721 = vmul.f32 %v716, %v720
      %v722 = vsub.f32 1.0, %v721
      %v723 = vmul.f32 %v720, %v722
      %v724 = vadd.f32 %v720, %v723
      %vm725 = vweird.f32 %v716
      %vm726 = vweird.f32 %v720
      %vm727 = vmor %vm725, %vm726
      %v728 = vsel %vm727, %v720, %v724
      %v729 = vand.u32 2147483647, %v716
      %vm730 = vcmp.eq.f32.partialorder %v729, 8.507059e+37
      %v731 = vand.u32 %v716, 2147483648
      %v732 = vor.u32 1.1754944e-38, %v731
      %v733 = vsel %vm730, %v732, %v728
      %v734 = vmul.f32 0.125, %v733
      %v735 = vrcp.pop %v719
      %v736 = vmul.f32 %v719, %v735
      %v737 = vsub.f32 1.0, %v736
      %v738 = vmul.f32 %v735, %v737
      %v739 = vadd.f32 %v735, %v738
      %vm740 = vweird.f32 %v719
      %vm741 = vweird.f32 %v735
      %vm742 = vmor %vm740, %vm741
      %v743 = vsel %vm742, %v735, %v739
      %v744 = vand.u32 2147483647, %v719
      %vm745 = vcmp.eq.f32.partialorder %v744, 8.507059e+37
      %v746 = vand.u32 %v719, 2147483648
      %v747 = vor.u32 1.1754944e-38, %v746
      %v748 = vsel %vm745, %v747, %v743
      %v749 = vmul.f32 0.125, %v748
      %v750 = vand.u32 2147483647, %v734
      %v751 = vand.u32 2147483647, %v749
      %vm752 = vcmp.lt.f32.partialorder %v750, inf
      %vm753 = vcmp.lt.f32.partialorder %v751, inf
      %vm754 = vmxor %vm752, 1
      %vm755 = vmxor %vm753, 1
      %v756 = vand.u32 2147483647, %v696
      %v757 = vand.u32 2147483647, %v711
      %vm758 = vcmp.lt.f32.partialorder %v756, inf
      %vm759 = vcmp.lt.f32.partialorder %v757, inf
      %vm760 = vmxor %vm758, 1
      %vm761 = vmxor %vm759, 1
      %v762 = vsel %vm754, 1, 0
      %v763 = vsel %vm755, 1, 0
      %v764 = vcvt.s32.f32 %v762
      %v765 = vcvt.s32.f32 %v763
      %v766 = vmax.f32 %v764, %v765
      %v767 = vrot.slane %v766, 4
      %v768 = vmax.f32 %v766, %v767
      %v769 = vrot.slane %v768, 2
      %v770 = vmax.f32 %v768, %v769
      %v771 = vrot.slane %v770, 1
      %v772 = vmax.f32 %v770, %v771
      %s773 = vtos %v772
      %v774 = vsel %vm760, 1, 0
      %v775 = vsel %vm761, 1, 0
      %v776 = vcvt.s32.f32 %v774
      %v777 = vcvt.s32.f32 %v775
      %v778 = vsel %vm193, %v776, -inf
      %779 = vmax.xlane.f32.xlu0 %v778
      %v780 = vpop.xlane.xlu0 %779
      %v781 = vsel %vm193, %v777, -inf
      %782 = vmax.xlane.f32.xlu0 %v781
      %v783 = vpop.xlane.xlu0 %782
      %v784 = vmax.f32 %v780, %v783
      %s785 = vtos %v784
      %s786 = smax.f32 %s773, %s785
      %p787 = scmp.gt.f32.partialorder %s786, 0.0
      %p788 = scmp.eq.s32.totalorder %s665, 0
      %p789 = pneg %p787
      %p790 = pnand %p788, %p789
      %p791 = pneg %p790
      %s792 = scalar_select %p791, 1, 0
      %v793 = vstv %s792
      %vm794 = vcmp.eq.s32.totalorder %v793, 1
      %v795 = vsel %vm794, %v734, %v661
      %v796 = vsel %vm794, %v749, %v662
      %v797 = vsel %vm794, %v696, %v663
      %v798 = vsel %vm794, %v711, %v664
      %s799 = scalar_select %p787, 1, %s665
      %v800 = vmul.f32 %v247, %v795
      %v801 = vmul.f32 %v249, %v796
      %v802 = vsel %vm193, %v800, 0.0
      %v803 = vrot.slane %v802, 4
      %v804 = vadd.f32 %v802, %v803
      %v805 = vrot.slane %v804, 2
      %v806 = vadd.f32 %v804, %v805
      %v807 = vrot.slane %v806, 1
      %v808 = vadd.f32 %v806, %v807
      %v809 = vsel %vm193, %v801, 0.0
      %v810 = vrot.slane %v809, 4
      %v811 = vadd.f32 %v809, %v810
      %v812 = vrot.slane %v811, 2
      %v813 = vadd.f32 %v811, %v812
      %v814 = vrot.slane %v813, 1
      %v815 = vadd.f32 %v813, %v814
      %v816 = vrcp.pop %v808
      %v817 = vmul.f32 %v808, %v816
      %v818 = vsub.f32 1.0, %v817
      %v819 = vmul.f32 %v816, %v818
      %v820 = vadd.f32 %v816, %v819
      %vm821 = vweird.f32 %v808
      %vm822 = vweird.f32 %v816
      %vm823 = vmor %vm821, %vm822
      %v824 = vsel %vm823, %v816, %v820
      %v825 = vand.u32 2147483647, %v808
      %vm826 = vcmp.eq.f32.partialorder %v825, 8.507059e+37
      %v827 = vand.u32 %v808, 2147483648
      %v828 = vor.u32 1.1754944e-38, %v827
      %v829 = vsel %vm826, %v828, %v824
      %v830 = vmul.f32 0.125, %v829
      %v831 = vrcp.pop %v815
      %v832 = vmul.f32 %v815, %v831
      %v833 = vsub.f32 1.0, %v832
      %v834 = vmul.f32 %v831, %v833
      %v835 = vadd.f32 %v831, %v834
      %vm836 = vweird.f32 %v815
      %vm837 = vweird.f32 %v831
      %vm838 = vmor %vm836, %vm837
      %v839 = vsel %vm838, %v831, %v835
      %v840 = vand.u32 2147483647, %v815
      %vm841 = vcmp.eq.f32.partialorder %v840, 8.507059e+37
      %v842 = vand.u32 %v815, 2147483648
      %v843 = vor.u32 1.1754944e-38, %v842
      %v844 = vsel %vm841, %v843, %v839
      %v845 = vmul.f32 0.125, %v844
      %v846 = vmul.f32 %v247, %v830
      %v847 = vmul.f32 %v249, %v845
      %v848 = vsel %vm193, %v846, 0.0
      %849 = vadd.xlane.f32.xlu0 %v848
      %v850 = vpop.xlane.xlu0 %849
      %v851 = vsel %vm193, %v847, 0.0
      %852 = vadd.xlane.f32.xlu0 %v851
      %v853 = vpop.xlane.xlu0 %852
      %v854 = vrcp.pop %v850
      %v855 = vmul.f32 %v850, %v854
      %v856 = vsub.f32 1.0, %v855
      %v857 = vmul.f32 %v854, %v856
      %v858 = vadd.f32 %v854, %v857
      %vm859 = vweird.f32 %v850
      %vm860 = vweird.f32 %v854
      %vm861 = vmor %vm859, %vm860
      %v862 = vsel %vm861, %v854, %v858
      %v863 = vand.u32 2147483647, %v850
      %vm864 = vcmp.eq.f32.partialorder %v863, 8.507059e+37
      %v865 = vand.u32 %v850, 2147483648
      %v866 = vor.u32 1.1754944e-38, %v865
      %v867 = vsel %vm864, %v866, %v862
      %v868 = vmul.f32 0.125, %v867
      %v869 = vrcp.pop %v853
      %v870 = vmul.f32 %v853, %v869
      %v871 = vsub.f32 1.0, %v870
      %v872 = vmul.f32 %v869, %v871
      %v873 = vadd.f32 %v869, %v872
      %vm874 = vweird.f32 %v853
      %vm875 = vweird.f32 %v869
      %vm876 = vmor %vm874, %vm875
      %v877 = vsel %vm876, %v869, %v873
      %v878 = vand.u32 2147483647, %v853
      %vm879 = vcmp.eq.f32.partialorder %v878, 8.507059e+37
      %v880 = vand.u32 %v853, 2147483648
      %v881 = vor.u32 1.1754944e-38, %v880
      %v882 = vsel %vm879, %v881, %v877
      %v883 = vmul.f32 0.125, %v882
      %v884 = vand.u32 2147483647, %v868
      %v885 = vand.u32 2147483647, %v883
      %vm886 = vcmp.lt.f32.partialorder %v884, inf
      %vm887 = vcmp.lt.f32.partialorder %v885, inf
      %vm888 = vmxor %vm886, 1
      %vm889 = vmxor %vm887, 1
      %v890 = vand.u32 2147483647, %v830
      %v891 = vand.u32 2147483647, %v845
      %vm892 = vcmp.lt.f32.partialorder %v890, inf
      %vm893 = vcmp.lt.f32.partialorder %v891, inf
      %vm894 = vmxor %vm892, 1
      %vm895 = vmxor %vm893, 1
      %v896 = vsel %vm888, 1, 0
      %v897 = vsel %vm889, 1, 0
      %v898 = vcvt.s32.f32 %v896
      %v899 = vcvt.s32.f32 %v897
      %v900 = vmax.f32 %v898, %v899
      %v901 = vrot.slane %v900, 4
      %v902 = vmax.f32 %v900, %v901
      %v903 = vrot.slane %v902, 2
      %v904 = vmax.f32 %v902, %v903
      %v905 = vrot.slane %v904, 1
      %v906 = vmax.f32 %v904, %v905
      %s907 = vtos %v906
      %v908 = vsel %vm894, 1, 0
      %v909 = vsel %vm895, 1, 0
      %v910 = vcvt.s32.f32 %v908
      %v911 = vcvt.s32.f32 %v909
      %v912 = vsel %vm193, %v910, -inf
      %913 = vmax.xlane.f32.xlu0 %v912
      %v914 = vpop.xlane.xlu0 %913
      %v915 = vsel %vm193, %v911, -inf
      %916 = vmax.xlane.f32.xlu0 %v915
      %v917 = vpop.xlane.xlu0 %916
      %v918 = vmax.f32 %v914, %v917
      %s919 = vtos %v918
      %s920 = smax.f32 %s907, %s919
      %p921 = scmp.gt.f32.partialorder %s920, 0.0
      %p922 = scmp.eq.s32.totalorder %s799, 0
      %p923 = pneg %p921
      %p924 = pnand %p922, %p923
      %p925 = pneg %p924
      %s926 = scalar_select %p925, 1, 0
      %v927 = vstv %s926
      %vm928 = vcmp.eq.s32.totalorder %v927, 1
      %v929 = vsel %vm928, %v868, %v795
      %v930 = vsel %vm928, %v883, %v796
      %v931 = vsel %vm928, %v830, %v797
      %v932 = vsel %vm928, %v845, %v798
      %s933 = scalar_select %p921, 1, %s799
      %v934 = vmul.f32 %v247, %v929
      %v935 = vmul.f32 %v249, %v930
      %v936 = vsel %vm193, %v934, 0.0
      %v937 = vrot.slane %v936, 4
      %v938 = vadd.f32 %v936, %v937
      %v939 = vrot.slane %v938, 2
      %v940 = vadd.f32 %v938, %v939
      %v941 = vrot.slane %v940, 1
      %v942 = vadd.f32 %v940, %v941
      %v943 = vsel %vm193, %v935, 0.0
      %v944 = vrot.slane %v943, 4
      %v945 = vadd.f32 %v943, %v944
      %v946 = vrot.slane %v945, 2
      %v947 = vadd.f32 %v945, %v946
      %v948 = vrot.slane %v947, 1
      %v949 = vadd.f32 %v947, %v948
      %v950 = vrcp.pop %v942
      %v951 = vmul.f32 %v942, %v950
      %v952 = vsub.f32 1.0, %v951
      %v953 = vmul.f32 %v950, %v952
      %v954 = vadd.f32 %v950, %v953
      %vm955 = vweird.f32 %v942
      %vm956 = vweird.f32 %v950
      %vm957 = vmor %vm955, %vm956
      %v958 = vsel %vm957, %v950, %v954
      %v959 = vand.u32 2147483647, %v942
      %vm960 = vcmp.eq.f32.partialorder %v959, 8.507059e+37
      %v961 = vand.u32 %v942, 2147483648
      %v962 = vor.u32 1.1754944e-38, %v961
      %v963 = vsel %vm960, %v962, %v958
      %v964 = vmul.f32 0.125, %v963
      %v965 = vrcp.pop %v949
      %v966 = vmul.f32 %v949, %v965
      %v967 = vsub.f32 1.0, %v966
      %v968 = vmul.f32 %v965, %v967
      %v969 = vadd.f32 %v965, %v968
      %vm970 = vweird.f32 %v949
      %vm971 = vweird.f32 %v965
      %vm972 = vmor %vm970, %vm971
      %v973 = vsel %vm972, %v965, %v969
      %v974 = vand.u32 2147483647, %v949
      %vm975 = vcmp.eq.f32.partialorder %v974, 8.507059e+37
      %v976 = vand.u32 %v949, 2147483648
      %v977 = vor.u32 1.1754944e-38, %v976
      %v978 = vsel %vm975, %v977, %v973
      %v979 = vmul.f32 0.125, %v978
      %v980 = vmul.f32 %v247, %v964
      %v981 = vmul.f32 %v249, %v979
      %v982 = vsel %vm193, %v980, 0.0
      %983 = vadd.xlane.f32.xlu0 %v982
      %v984 = vpop.xlane.xlu0 %983
      %v985 = vsel %vm193, %v981, 0.0
      %986 = vadd.xlane.f32.xlu0 %v985
      %v987 = vpop.xlane.xlu0 %986
      %v988 = vrcp.pop %v984
      %v989 = vmul.f32 %v984, %v988
      %v990 = vsub.f32 1.0, %v989
      %v991 = vmul.f32 %v988, %v990
      %v992 = vadd.f32 %v988, %v991
      %vm993 = vweird.f32 %v984
      %vm994 = vweird.f32 %v988
      %vm995 = vmor %vm993, %vm994
      %v996 = vsel %vm995, %v988, %v992
      %v997 = vand.u32 2147483647, %v984
      %vm998 = vcmp.eq.f32.partialorder %v997, 8.507059e+37
      %v999 = vand.u32 %v984, 2147483648
      %v1000 = vor.u32 1.1754944e-38, %v999
      %v1001 = vsel %vm998, %v1000, %v996
      %v1002 = vmul.f32 0.125, %v1001
      %v1003 = vrcp.pop %v987
      %v1004 = vmul.f32 %v987, %v1003
      %v1005 = vsub.f32 1.0, %v1004
      %v1006 = vmul.f32 %v1003, %v1005
      %v1007 = vadd.f32 %v1003, %v1006
      %vm1008 = vweird.f32 %v987
      %vm1009 = vweird.f32 %v1003
      %vm1010 = vmor %vm1008, %vm1009
      %v1011 = vsel %vm1010, %v1003, %v1007
      %v1012 = vand.u32 2147483647, %v987
      %vm1013 = vcmp.eq.f32.partialorder %v1012, 8.507059e+37
      %v1014 = vand.u32 %v987, 2147483648
      %v1015 = vor.u32 1.1754944e-38, %v1014
      %v1016 = vsel %vm1013, %v1015, %v1011
      %v1017 = vmul.f32 0.125, %v1016
      %v1018 = vand.u32 2147483647, %v1002
      %v1019 = vand.u32 2147483647, %v1017
      %vm1020 = vcmp.lt.f32.partialorder %v1018, inf
      %vm1021 = vcmp.lt.f32.partialorder %v1019, inf
      %vm1022 = vmxor %vm1020, 1
      %vm1023 = vmxor %vm1021, 1
      %v1024 = vand.u32 2147483647, %v964
      %v1025 = vand.u32 2147483647, %v979
      %vm1026 = vcmp.lt.f32.partialorder %v1024, inf
      %vm1027 = vcmp.lt.f32.partialorder %v1025, inf
      %vm1028 = vmxor %vm1026, 1
      %vm1029 = vmxor %vm1027, 1
      %v1030 = vsel %vm1022, 1, 0
      %v1031 = vsel %vm1023, 1, 0
      %v1032 = vcvt.s32.f32 %v1030
      %v1033 = vcvt.s32.f32 %v1031
      %v1034 = vmax.f32 %v1032, %v1033
      %v1035 = vrot.slane %v1034, 4
      %v1036 = vmax.f32 %v1034, %v1035
      %v1037 = vrot.slane %v1036, 2
      %v1038 = vmax.f32 %v1036, %v1037
      %v1039 = vrot.slane %v1038, 1
      %v1040 = vmax.f32 %v1038, %v1039
      %s1041 = vtos %v1040
      %v1042 = vsel %vm1028, 1, 0
      %v1043 = vsel %vm1029, 1, 0
      %v1044 = vcvt.s32.f32 %v1042
      %v1045 = vcvt.s32.f32 %v1043
      %v1046 = vsel %vm193, %v1044, -inf
      %1047 = vmax.xlane.f32.xlu0 %v1046
      %v1048 = vpop.xlane.xlu0 %1047
      %v1049 = vsel %vm193, %v1045, -inf
      %1050 = vmax.xlane.f32.xlu0 %v1049
      %v1051 = vpop.xlane.xlu0 %1050
      %v1052 = vmax.f32 %v1048, %v1051
      %s1053 = vtos %v1052
      %s1054 = smax.f32 %s1041, %s1053
      %p1055 = scmp.gt.f32.partialorder %s1054, 0.0
      %p1056 = scmp.eq.s32.totalorder %s933, 0
      %p1057 = pneg %p1055
      %p1058 = pnand %p1056, %p1057
      %p1059 = pneg %p1058
      %s1060 = scalar_select %p1059, 1, 0
      %v1061 = vstv %s1060
      %vm1062 = vcmp.eq.s32.totalorder %v1061, 1
      %v1063 = vsel %vm1062, %v1002, %v929
      %v1064 = vsel %vm1062, %v1017, %v930
      %v1065 = vsel %vm1062, %v964, %v931
      %v1066 = vsel %vm1062, %v979, %v932
      %s1067 = scalar_select %p1055, 1, %s933
      %v1068 = vmul.f32 %v247, %v1063
      %v1069 = vmul.f32 %v249, %v1064
      %v1070 = vsel %vm193, %v1068, 0.0
      %v1071 = vrot.slane %v1070, 4
      %v1072 = vadd.f32 %v1070, %v1071
      %v1073 = vrot.slane %v1072, 2
      %v1074 = vadd.f32 %v1072, %v1073
      %v1075 = vrot.slane %v1074, 1
      %v1076 = vadd.f32 %v1074, %v1075
      %v1077 = vsel %vm193, %v1069, 0.0
      %v1078 = vrot.slane %v1077, 4
      %v1079 = vadd.f32 %v1077, %v1078
      %v1080 = vrot.slane %v1079, 2
      %v1081 = vadd.f32 %v1079, %v1080
      %v1082 = vrot.slane %v1081, 1
      %v1083 = vadd.f32 %v1081, %v1082
      %v1084 = vrcp.pop %v1076
      %v1085 = vmul.f32 %v1076, %v1084
      %v1086 = vsub.f32 1.0, %v1085
      %v1087 = vmul.f32 %v1084, %v1086
      %v1088 = vadd.f32 %v1084, %v1087
      %vm1089 = vweird.f32 %v1076
      %vm1090 = vweird.f32 %v1084
      %vm1091 = vmor %vm1089, %vm1090
      %v1092 = vsel %vm1091, %v1084, %v1088
      %v1093 = vand.u32 2147483647, %v1076
      %vm1094 = vcmp.eq.f32.partialorder %v1093, 8.507059e+37
      %v1095 = vand.u32 %v1076, 2147483648
      %v1096 = vor.u32 1.1754944e-38, %v1095
      %v1097 = vsel %vm1094, %v1096, %v1092
      %v1098 = vmul.f32 0.125, %v1097
      %v1099 = vrcp.pop %v1083
      %v1100 = vmul.f32 %v1083, %v1099
      %v1101 = vsub.f32 1.0, %v1100
      %v1102 = vmul.f32 %v1099, %v1101
      %v1103 = vadd.f32 %v1099, %v1102
      %vm1104 = vweird.f32 %v1083
      %vm1105 = vweird.f32 %v1099
      %vm1106 = vmor %vm1104, %vm1105
      %v1107 = vsel %vm1106, %v1099, %v1103
      %v1108 = vand.u32 2147483647, %v1083
      %vm1109 = vcmp.eq.f32.partialorder %v1108, 8.507059e+37
      %v1110 = vand.u32 %v1083, 2147483648
      %v1111 = vor.u32 1.1754944e-38, %v1110
      %v1112 = vsel %vm1109, %v1111, %v1107
      %v1113 = vmul.f32 0.125, %v1112
      %v1114 = vmul.f32 %v247, %v1098
      %v1115 = vmul.f32 %v249, %v1113
      %v1116 = vsel %vm193, %v1114, 0.0
      %1117 = vadd.xlane.f32.xlu0 %v1116
      %v1118 = vpop.xlane.xlu0 %1117
      %v1119 = vsel %vm193, %v1115, 0.0
      %1120 = vadd.xlane.f32.xlu0 %v1119
      %v1121 = vpop.xlane.xlu0 %1120
      %v1122 = vrcp.pop %v1118
      %v1123 = vmul.f32 %v1118, %v1122
      %v1124 = vsub.f32 1.0, %v1123
      %v1125 = vmul.f32 %v1122, %v1124
      %v1126 = vadd.f32 %v1122, %v1125
      %vm1127 = vweird.f32 %v1118
      %vm1128 = vweird.f32 %v1122
      %vm1129 = vmor %vm1127, %vm1128
      %v1130 = vsel %vm1129, %v1122, %v1126
      %v1131 = vand.u32 2147483647, %v1118
      %vm1132 = vcmp.eq.f32.partialorder %v1131, 8.507059e+37
      %v1133 = vand.u32 %v1118, 2147483648
      %v1134 = vor.u32 1.1754944e-38, %v1133
      %v1135 = vsel %vm1132, %v1134, %v1130
      %v1136 = vmul.f32 0.125, %v1135
      %v1137 = vrcp.pop %v1121
      %v1138 = vmul.f32 %v1121, %v1137
      %v1139 = vsub.f32 1.0, %v1138
      %v1140 = vmul.f32 %v1137, %v1139
      %v1141 = vadd.f32 %v1137, %v1140
      %vm1142 = vweird.f32 %v1121
      %vm1143 = vweird.f32 %v1137
      %vm1144 = vmor %vm1142, %vm1143
      %v1145 = vsel %vm1144, %v1137, %v1141
      %v1146 = vand.u32 2147483647, %v1121
      %vm1147 = vcmp.eq.f32.partialorder %v1146, 8.507059e+37
      %v1148 = vand.u32 %v1121, 2147483648
      %v1149 = vor.u32 1.1754944e-38, %v1148
      %v1150 = vsel %vm1147, %v1149, %v1145
      %v1151 = vmul.f32 0.125, %v1150
      %v1152 = vand.u32 2147483647, %v1136
      %v1153 = vand.u32 2147483647, %v1151
      %vm1154 = vcmp.lt.f32.partialorder %v1152, inf
      %vm1155 = vcmp.lt.f32.partialorder %v1153, inf
      %vm1156 = vmxor %vm1154, 1
      %vm1157 = vmxor %vm1155, 1
      %v1158 = vand.u32 2147483647, %v1098
      %v1159 = vand.u32 2147483647, %v1113
      %vm1160 = vcmp.lt.f32.partialorder %v1158, inf
      %vm1161 = vcmp.lt.f32.partialorder %v1159, inf
      %vm1162 = vmxor %vm1160, 1
      %vm1163 = vmxor %vm1161, 1
      %v1164 = vsel %vm1156, 1, 0
      %v1165 = vsel %vm1157, 1, 0
      %v1166 = vcvt.s32.f32 %v1164
      %v1167 = vcvt.s32.f32 %v1165
      %v1168 = vmax.f32 %v1166, %v1167
      %v1169 = vrot.slane %v1168, 4
      %v1170 = vmax.f32 %v1168, %v1169
      %v1171 = vrot.slane %v1170, 2
      %v1172 = vmax.f32 %v1170, %v1171
      %v1173 = vrot.slane %v1172, 1
      %v1174 = vmax.f32 %v1172, %v1173
      %s1175 = vtos %v1174
      %v1176 = vsel %vm1162, 1, 0
      %v1177 = vsel %vm1163, 1, 0
      %v1178 = vcvt.s32.f32 %v1176
      %v1179 = vcvt.s32.f32 %v1177
      %v1180 = vsel %vm193, %v1178, -inf
      %1181 = vmax.xlane.f32.xlu0 %v1180
      %v1182 = vpop.xlane.xlu0 %1181
      %v1183 = vsel %vm193, %v1179, -inf
      %1184 = vmax.xlane.f32.xlu0 %v1183
      %v1185 = vpop.xlane.xlu0 %1184
      %v1186 = vmax.f32 %v1182, %v1185
      %s1187 = vtos %v1186
      %s1188 = smax.f32 %s1175, %s1187
      %p1189 = scmp.gt.f32.partialorder %s1188, 0.0
      %p1190 = scmp.eq.s32.totalorder %s1067, 0
      %p1191 = pneg %p1189
      %p1192 = pnand %p1190, %p1191
      %p1193 = pneg %p1192
      %s1194 = scalar_select %p1193, 1, 0
      %v1195 = vstv %s1194
      %vm1196 = vcmp.eq.s32.totalorder %v1195, 1
      %v1197 = vsel %vm1196, %v1136, %v1063
      %v1198 = vsel %vm1196, %v1151, %v1064
      %v1199 = vsel %vm1196, %v1098, %v1065
      %v1200 = vsel %vm1196, %v1113, %v1066
      %s1201 = scalar_select %p1189, 1, %s1067
      %v1202 = vmul.f32 %v247, %v1197
      %v1203 = vmul.f32 %v249, %v1198
      %v1204 = vsel %vm193, %v1202, 0.0
      %v1205 = vrot.slane %v1204, 4
      %v1206 = vadd.f32 %v1204, %v1205
      %v1207 = vrot.slane %v1206, 2
      %v1208 = vadd.f32 %v1206, %v1207
      %v1209 = vrot.slane %v1208, 1
      %v1210 = vadd.f32 %v1208, %v1209
      %v1211 = vsel %vm193, %v1203, 0.0
      %v1212 = vrot.slane %v1211, 4
      %v1213 = vadd.f32 %v1211, %v1212
      %v1214 = vrot.slane %v1213, 2
      %v1215 = vadd.f32 %v1213, %v1214
      %v1216 = vrot.slane %v1215, 1
      %v1217 = vadd.f32 %v1215, %v1216
      %v1218 = vrcp.pop %v1210
      %v1219 = vmul.f32 %v1210, %v1218
      %v1220 = vsub.f32 1.0, %v1219
      %v1221 = vmul.f32 %v1218, %v1220
      %v1222 = vadd.f32 %v1218, %v1221
      %vm1223 = vweird.f32 %v1210
      %vm1224 = vweird.f32 %v1218
      %vm1225 = vmor %vm1223, %vm1224
      %v1226 = vsel %vm1225, %v1218, %v1222
      %v1227 = vand.u32 2147483647, %v1210
      %vm1228 = vcmp.eq.f32.partialorder %v1227, 8.507059e+37
      %v1229 = vand.u32 %v1210, 2147483648
      %v1230 = vor.u32 1.1754944e-38, %v1229
      %v1231 = vsel %vm1228, %v1230, %v1226
      %v1232 = vmul.f32 0.125, %v1231
      %v1233 = vrcp.pop %v1217
      %v1234 = vmul.f32 %v1217, %v1233
      %v1235 = vsub.f32 1.0, %v1234
      %v1236 = vmul.f32 %v1233, %v1235
      %v1237 = vadd.f32 %v1233, %v1236
      %vm1238 = vweird.f32 %v1217
      %vm1239 = vweird.f32 %v1233
      %vm1240 = vmor %vm1238, %vm1239
      %v1241 = vsel %vm1240, %v1233, %v1237
      %v1242 = vand.u32 2147483647, %v1217
      %vm1243 = vcmp.eq.f32.partialorder %v1242, 8.507059e+37
      %v1244 = vand.u32 %v1217, 2147483648
      %v1245 = vor.u32 1.1754944e-38, %v1244
      %v1246 = vsel %vm1243, %v1245, %v1241
      %v1247 = vmul.f32 0.125, %v1246
      %v1248 = vmul.f32 %v247, %v1232
      %v1249 = vmul.f32 %v249, %v1247
      %v1250 = vsel %vm193, %v1248, 0.0
      %1251 = vadd.xlane.f32.xlu0 %v1250
      %v1252 = vpop.xlane.xlu0 %1251
      %v1253 = vsel %vm193, %v1249, 0.0
      %1254 = vadd.xlane.f32.xlu0 %v1253
      %v1255 = vpop.xlane.xlu0 %1254
      %v1256 = vrcp.pop %v1252
      %v1257 = vmul.f32 %v1252, %v1256
      %v1258 = vsub.f32 1.0, %v1257
      %v1259 = vmul.f32 %v1256, %v1258
      %v1260 = vadd.f32 %v1256, %v1259
      %vm1261 = vweird.f32 %v1252
      %vm1262 = vweird.f32 %v1256
      %vm1263 = vmor %vm1261, %vm1262
      %v1264 = vsel %vm1263, %v1256, %v1260
      %v1265 = vand.u32 2147483647, %v1252
      %vm1266 = vcmp.eq.f32.partialorder %v1265, 8.507059e+37
      %v1267 = vand.u32 %v1252, 2147483648
      %v1268 = vor.u32 1.1754944e-38, %v1267
      %v1269 = vsel %vm1266, %v1268, %v1264
      %v1270 = vmul.f32 0.125, %v1269
      %v1271 = vrcp.pop %v1255
      %v1272 = vmul.f32 %v1255, %v1271
      %v1273 = vsub.f32 1.0, %v1272
      %v1274 = vmul.f32 %v1271, %v1273
      %v1275 = vadd.f32 %v1271, %v1274
      %vm1276 = vweird.f32 %v1255
      %vm1277 = vweird.f32 %v1271
      %vm1278 = vmor %vm1276, %vm1277
      %v1279 = vsel %vm1278, %v1271, %v1275
      %v1280 = vand.u32 2147483647, %v1255
      %vm1281 = vcmp.eq.f32.partialorder %v1280, 8.507059e+37
      %v1282 = vand.u32 %v1255, 2147483648
      %v1283 = vor.u32 1.1754944e-38, %v1282
      %v1284 = vsel %vm1281, %v1283, %v1279
      %v1285 = vmul.f32 0.125, %v1284
      %v1286 = vand.u32 2147483647, %v1270
      %v1287 = vand.u32 2147483647, %v1285
      %vm1288 = vcmp.lt.f32.partialorder %v1286, inf
      %vm1289 = vcmp.lt.f32.partialorder %v1287, inf
      %vm1290 = vmxor %vm1288, 1
      %vm1291 = vmxor %vm1289, 1
      %v1292 = vand.u32 2147483647, %v1232
      %v1293 = vand.u32 2147483647, %v1247
      %vm1294 = vcmp.lt.f32.partialorder %v1292, inf
      %vm1295 = vcmp.lt.f32.partialorder %v1293, inf
      %vm1296 = vmxor %vm1294, 1
      %vm1297 = vmxor %vm1295, 1
      %v1298 = vsel %vm1290, 1, 0
      %v1299 = vsel %vm1291, 1, 0
      %v1300 = vcvt.s32.f32 %v1298
      %v1301 = vcvt.s32.f32 %v1299
      %v1302 = vmax.f32 %v1300, %v1301
      %v1303 = vrot.slane %v1302, 4
      %v1304 = vmax.f32 %v1302, %v1303
      %v1305 = vrot.slane %v1304, 2
      %v1306 = vmax.f32 %v1304, %v1305
      %v1307 = vrot.slane %v1306, 1
      %v1308 = vmax.f32 %v1306, %v1307
      %s1309 = vtos %v1308
      %v1310 = vsel %vm1296, 1, 0
      %v1311 = vsel %vm1297, 1, 0
      %v1312 = vcvt.s32.f32 %v1310
      %v1313 = vcvt.s32.f32 %v1311
      %v1314 = vsel %vm193, %v1312, -inf
      %1315 = vmax.xlane.f32.xlu0 %v1314
      %v1316 = vpop.xlane.xlu0 %1315
      %v1317 = vsel %vm193, %v1313, -inf
      %1318 = vmax.xlane.f32.xlu0 %v1317
      %v1319 = vpop.xlane.xlu0 %1318
      %v1320 = vmax.f32 %v1316, %v1319
      %s1321 = vtos %v1320
      %s1322 = smax.f32 %s1309, %s1321
      %p1323 = scmp.gt.f32.partialorder %s1322, 0.0
      %p1324 = scmp.eq.s32.totalorder %s1201, 0
      %p1325 = pneg %p1323
      %p1326 = pnand %p1324, %p1325
      %p1327 = pneg %p1326
      %s1328 = scalar_select %p1327, 1, 0
      %v1329 = vstv %s1328
      %vm1330 = vcmp.eq.s32.totalorder %v1329, 1
      %v1331 = vsel %vm1330, %v1270, %v1197
      %v1332 = vsel %vm1330, %v1285, %v1198
      %v1333 = vsel %vm1330, %v1232, %v1199
      %v1334 = vsel %vm1330, %v1247, %v1200
      %s1335 = scalar_select %p1323, 1, %s1201
      %v1336 = vmul.f32 %v247, %v1331
      %v1337 = vmul.f32 %v249, %v1332
      %v1338 = vsel %vm193, %v1336, 0.0
      %v1339 = vrot.slane %v1338, 4
      %v1340 = vadd.f32 %v1338, %v1339
      %v1341 = vrot.slane %v1340, 2
      %v1342 = vadd.f32 %v1340, %v1341
      %v1343 = vrot.slane %v1342, 1
      %v1344 = vadd.f32 %v1342, %v1343
      %v1345 = vsel %vm193, %v1337, 0.0
      %v1346 = vrot.slane %v1345, 4
      %v1347 = vadd.f32 %v1345, %v1346
      %v1348 = vrot.slane %v1347, 2
      %v1349 = vadd.f32 %v1347, %v1348
      %v1350 = vrot.slane %v1349, 1
      %v1351 = vadd.f32 %v1349, %v1350
      %v1352 = vrcp.pop %v1344
      %v1353 = vmul.f32 %v1344, %v1352
      %v1354 = vsub.f32 1.0, %v1353
      %v1355 = vmul.f32 %v1352, %v1354
      %v1356 = vadd.f32 %v1352, %v1355
      %vm1357 = vweird.f32 %v1344
      %vm1358 = vweird.f32 %v1352
      %vm1359 = vmor %vm1357, %vm1358
      %v1360 = vsel %vm1359, %v1352, %v1356
      %v1361 = vand.u32 2147483647, %v1344
      %vm1362 = vcmp.eq.f32.partialorder %v1361, 8.507059e+37
      %v1363 = vand.u32 %v1344, 2147483648
      %v1364 = vor.u32 1.1754944e-38, %v1363
      %v1365 = vsel %vm1362, %v1364, %v1360
      %v1366 = vmul.f32 0.125, %v1365
      %v1367 = vrcp.pop %v1351
      %v1368 = vmul.f32 %v1351, %v1367
      %v1369 = vsub.f32 1.0, %v1368
      %v1370 = vmul.f32 %v1367, %v1369
      %v1371 = vadd.f32 %v1367, %v1370
      %vm1372 = vweird.f32 %v1351
      %vm1373 = vweird.f32 %v1367
      %vm1374 = vmor %vm1372, %vm1373
      %v1375 = vsel %vm1374, %v1367, %v1371
      %v1376 = vand.u32 2147483647, %v1351
      %vm1377 = vcmp.eq.f32.partialorder %v1376, 8.507059e+37
      %v1378 = vand.u32 %v1351, 2147483648
      %v1379 = vor.u32 1.1754944e-38, %v1378
      %v1380 = vsel %vm1377, %v1379, %v1375
      %v1381 = vmul.f32 0.125, %v1380
      %v1382 = vmul.f32 %v247, %v1366
      %v1383 = vmul.f32 %v249, %v1381
      %v1384 = vsel %vm193, %v1382, 0.0
      %1385 = vadd.xlane.f32.xlu0 %v1384
      %v1386 = vpop.xlane.xlu0 %1385
      %v1387 = vsel %vm193, %v1383, 0.0
      %1388 = vadd.xlane.f32.xlu0 %v1387
      %v1389 = vpop.xlane.xlu0 %1388
      %v1390 = vrcp.pop %v1386
      %v1391 = vmul.f32 %v1386, %v1390
      %v1392 = vsub.f32 1.0, %v1391
      %v1393 = vmul.f32 %v1390, %v1392
      %v1394 = vadd.f32 %v1390, %v1393
      %vm1395 = vweird.f32 %v1386
      %vm1396 = vweird.f32 %v1390
      %vm1397 = vmor %vm1395, %vm1396
      %v1398 = vsel %vm1397, %v1390, %v1394
      %v1399 = vand.u32 2147483647, %v1386
      %vm1400 = vcmp.eq.f32.partialorder %v1399, 8.507059e+37
      %v1401 = vand.u32 %v1386, 2147483648
      %v1402 = vor.u32 1.1754944e-38, %v1401
      %v1403 = vsel %vm1400, %v1402, %v1398
      %v1404 = vmul.f32 0.125, %v1403
      %v1405 = vrcp.pop %v1389
      %v1406 = vmul.f32 %v1389, %v1405
      %v1407 = vsub.f32 1.0, %v1406
      %v1408 = vmul.f32 %v1405, %v1407
      %v1409 = vadd.f32 %v1405, %v1408
      %vm1410 = vweird.f32 %v1389
      %vm1411 = vweird.f32 %v1405
      %vm1412 = vmor %vm1410, %vm1411
      %v1413 = vsel %vm1412, %v1405, %v1409
      %v1414 = vand.u32 2147483647, %v1389
      %vm1415 = vcmp.eq.f32.partialorder %v1414, 8.507059e+37
      %v1416 = vand.u32 %v1389, 2147483648
      %v1417 = vor.u32 1.1754944e-38, %v1416
      %v1418 = vsel %vm1415, %v1417, %v1413
      %v1419 = vmul.f32 0.125, %v1418
      %v1420 = vand.u32 2147483647, %v1404
      %v1421 = vand.u32 2147483647, %v1419
      %vm1422 = vcmp.lt.f32.partialorder %v1420, inf
      %vm1423 = vcmp.lt.f32.partialorder %v1421, inf
      %vm1424 = vmxor %vm1422, 1
      %vm1425 = vmxor %vm1423, 1
      %v1426 = vand.u32 2147483647, %v1366
      %v1427 = vand.u32 2147483647, %v1381
      %vm1428 = vcmp.lt.f32.partialorder %v1426, inf
      %vm1429 = vcmp.lt.f32.partialorder %v1427, inf
      %vm1430 = vmxor %vm1428, 1
      %vm1431 = vmxor %vm1429, 1
      %v1432 = vsel %vm1424, 1, 0
      %v1433 = vsel %vm1425, 1, 0
      %v1434 = vcvt.s32.f32 %v1432
      %v1435 = vcvt.s32.f32 %v1433
      %v1436 = vmax.f32 %v1434, %v1435
      %v1437 = vrot.slane %v1436, 4
      %v1438 = vmax.f32 %v1436, %v1437
      %v1439 = vrot.slane %v1438, 2
      %v1440 = vmax.f32 %v1438, %v1439
      %v1441 = vrot.slane %v1440, 1
      %v1442 = vmax.f32 %v1440, %v1441
      %s1443 = vtos %v1442
      %v1444 = vsel %vm1430, 1, 0
      %v1445 = vsel %vm1431, 1, 0
      %v1446 = vcvt.s32.f32 %v1444
      %v1447 = vcvt.s32.f32 %v1445
      %v1448 = vsel %vm193, %v1446, -inf
      %1449 = vmax.xlane.f32.xlu0 %v1448
      %v1450 = vpop.xlane.xlu0 %1449
      %v1451 = vsel %vm193, %v1447, -inf
      %1452 = vmax.xlane.f32.xlu0 %v1451
      %v1453 = vpop.xlane.xlu0 %1452
      %v1454 = vmax.f32 %v1450, %v1453
      %s1455 = vtos %v1454
      %s1456 = smax.f32 %s1443, %s1455
      %p1457 = scmp.gt.f32.partialorder %s1456, 0.0
      %p1458 = scmp.eq.s32.totalorder %s1335, 0
      %p1459 = pneg %p1457
      %p1460 = pnand %p1458, %p1459
      %p1461 = pneg %p1460
      %s1462 = scalar_select %p1461, 1, 0
      %v1463 = vstv %s1462
      %vm1464 = vcmp.eq.s32.totalorder %v1463, 1
      %v1465 = vsel %vm1464, %v1404, %v1331
      %v1466 = vsel %vm1464, %v1419, %v1332
      %v1467 = vsel %vm1464, %v1366, %v1333
      %v1468 = vsel %vm1464, %v1381, %v1334
      %s1469 = scalar_select %p1457, 1, %s1335
      %v1470 = vmul.f32 %v247, %v1465
      %v1471 = vmul.f32 %v249, %v1466
      %v1472 = vsel %vm193, %v1470, 0.0
      %v1473 = vrot.slane %v1472, 4
      %v1474 = vadd.f32 %v1472, %v1473
      %v1475 = vrot.slane %v1474, 2
      %v1476 = vadd.f32 %v1474, %v1475
      %v1477 = vrot.slane %v1476, 1
      %v1478 = vadd.f32 %v1476, %v1477
      %v1479 = vsel %vm193, %v1471, 0.0
      %v1480 = vrot.slane %v1479, 4
      %v1481 = vadd.f32 %v1479, %v1480
      %v1482 = vrot.slane %v1481, 2
      %v1483 = vadd.f32 %v1481, %v1482
      %v1484 = vrot.slane %v1483, 1
      %v1485 = vadd.f32 %v1483, %v1484
      %v1486 = vrcp.pop %v1478
      %v1487 = vmul.f32 %v1478, %v1486
      %v1488 = vsub.f32 1.0, %v1487
      %v1489 = vmul.f32 %v1486, %v1488
      %v1490 = vadd.f32 %v1486, %v1489
      %vm1491 = vweird.f32 %v1478
      %vm1492 = vweird.f32 %v1486
      %vm1493 = vmor %vm1491, %vm1492
      %v1494 = vsel %vm1493, %v1486, %v1490
      %v1495 = vand.u32 2147483647, %v1478
      %vm1496 = vcmp.eq.f32.partialorder %v1495, 8.507059e+37
      %v1497 = vand.u32 %v1478, 2147483648
      %v1498 = vor.u32 1.1754944e-38, %v1497
      %v1499 = vsel %vm1496, %v1498, %v1494
      %v1500 = vmul.f32 0.125, %v1499
      %v1501 = vrcp.pop %v1485
      %v1502 = vmul.f32 %v1485, %v1501
      %v1503 = vsub.f32 1.0, %v1502
      %v1504 = vmul.f32 %v1501, %v1503
      %v1505 = vadd.f32 %v1501, %v1504
      %vm1506 = vweird.f32 %v1485
      %vm1507 = vweird.f32 %v1501
      %vm1508 = vmor %vm1506, %vm1507
      %v1509 = vsel %vm1508, %v1501, %v1505
      %v1510 = vand.u32 2147483647, %v1485
      %vm1511 = vcmp.eq.f32.partialorder %v1510, 8.507059e+37
      %v1512 = vand.u32 %v1485, 2147483648
      %v1513 = vor.u32 1.1754944e-38, %v1512
      %v1514 = vsel %vm1511, %v1513, %v1509
      %v1515 = vmul.f32 0.125, %v1514
      %v1516 = vmul.f32 %v247, %v1500
      %v1517 = vmul.f32 %v249, %v1515
      %v1518 = vsel %vm193, %v1516, 0.0
      %1519 = vadd.xlane.f32.xlu0 %v1518
      %v1520 = vpop.xlane.xlu0 %1519
      %v1521 = vsel %vm193, %v1517, 0.0
      %1522 = vadd.xlane.f32.xlu0 %v1521
      %v1523 = vpop.xlane.xlu0 %1522
      %v1524 = vrcp.pop %v1520
      %v1525 = vmul.f32 %v1520, %v1524
      %v1526 = vsub.f32 1.0, %v1525
      %v1527 = vmul.f32 %v1524, %v1526
      %v1528 = vadd.f32 %v1524, %v1527
      %vm1529 = vweird.f32 %v1520
      %vm1530 = vweird.f32 %v1524
      %vm1531 = vmor %vm1529, %vm1530
      %v1532 = vsel %vm1531, %v1524, %v1528
      %v1533 = vand.u32 2147483647, %v1520
      %vm1534 = vcmp.eq.f32.partialorder %v1533, 8.507059e+37
      %v1535 = vand.u32 %v1520, 2147483648
      %v1536 = vor.u32 1.1754944e-38, %v1535
      %v1537 = vsel %vm1534, %v1536, %v1532
      %v1538 = vmul.f32 0.125, %v1537
      %v1539 = vrcp.pop %v1523
      %v1540 = vmul.f32 %v1523, %v1539
      %v1541 = vsub.f32 1.0, %v1540
      %v1542 = vmul.f32 %v1539, %v1541
      %v1543 = vadd.f32 %v1539, %v1542
      %vm1544 = vweird.f32 %v1523
      %vm1545 = vweird.f32 %v1539
      %vm1546 = vmor %vm1544, %vm1545
      %v1547 = vsel %vm1546, %v1539, %v1543
      %v1548 = vand.u32 2147483647, %v1523
      %vm1549 = vcmp.eq.f32.partialorder %v1548, 8.507059e+37
      %v1550 = vand.u32 %v1523, 2147483648
      %v1551 = vor.u32 1.1754944e-38, %v1550
      %v1552 = vsel %vm1549, %v1551, %v1547
      %v1553 = vmul.f32 0.125, %v1552
      %v1554 = vand.u32 2147483647, %v1538
      %v1555 = vand.u32 2147483647, %v1553
      %vm1556 = vcmp.lt.f32.partialorder %v1554, inf
      %vm1557 = vcmp.lt.f32.partialorder %v1555, inf
      %vm1558 = vmxor %vm1556, 1
      %vm1559 = vmxor %vm1557, 1
      %v1560 = vand.u32 2147483647, %v1500
      %v1561 = vand.u32 2147483647, %v1515
      %vm1562 = vcmp.lt.f32.partialorder %v1560, inf
      %vm1563 = vcmp.lt.f32.partialorder %v1561, inf
      %vm1564 = vmxor %vm1562, 1
      %vm1565 = vmxor %vm1563, 1
      %v1566 = vsel %vm1558, 1, 0
      %v1567 = vsel %vm1559, 1, 0
      %v1568 = vcvt.s32.f32 %v1566
      %v1569 = vcvt.s32.f32 %v1567
      %v1570 = vmax.f32 %v1568, %v1569
      %v1571 = vrot.slane %v1570, 4
      %v1572 = vmax.f32 %v1570, %v1571
      %v1573 = vrot.slane %v1572, 2
      %v1574 = vmax.f32 %v1572, %v1573
      %v1575 = vrot.slane %v1574, 1
      %v1576 = vmax.f32 %v1574, %v1575
      %s1577 = vtos %v1576
      %v1578 = vsel %vm1564, 1, 0
      %v1579 = vsel %vm1565, 1, 0
      %v1580 = vcvt.s32.f32 %v1578
      %v1581 = vcvt.s32.f32 %v1579
      %v1582 = vsel %vm193, %v1580, -inf
      %1583 = vmax.xlane.f32.xlu0 %v1582
      %v1584 = vpop.xlane.xlu0 %1583
      %v1585 = vsel %vm193, %v1581, -inf
      %1586 = vmax.xlane.f32.xlu0 %v1585
      %v1587 = vpop.xlane.xlu0 %1586
      %v1588 = vmax.f32 %v1584, %v1587
      %s1589 = vtos %v1588
      %s1590 = smax.f32 %s1577, %s1589
      %p1591 = scmp.gt.f32.partialorder %s1590, 0.0
      %p1592 = scmp.eq.s32.totalorder %s1469, 0
      %p1593 = pneg %p1591
      %p1594 = pnand %p1592, %p1593
      %p1595 = pneg %p1594
      %s1596 = scalar_select %p1595, 1, 0
      %v1597 = vstv %s1596
      %vm1598 = vcmp.eq.s32.totalorder %v1597, 1
      %v1599 = vsel %vm1598, %v1538, %v1465
      %v1600 = vsel %vm1598, %v1553, %v1466
      %v1601 = vsel %vm1598, %v1500, %v1467
      %v1602 = vsel %vm1598, %v1515, %v1468
      %s1603 = scalar_select %p1591, 1, %s1469
      %v1604 = vmul.f32 %v1599, %v247
      %v1605 = vmul.f32 %v1600, %v249
      %v1606 = vmul.f32 %v1604, %v1601
      %v1607 = vmul.f32 %v1605, %v1602
      %v1608 = vsub.f32 %v260, %v1606
      %v1609 = vsub.f32 %v261, %v1607
      %v1610 = vand.u32 2147483647, %v1608
      %v1611 = vand.u32 2147483647, %v1609
      %v1612 = vsel %vm193, %v1610, -inf
      %1613 = vmax.xlane.f32.xlu0 %v1612
      %v1614 = vpop.xlane.xlu0 %1613
      %v1615 = vsel %vm193, %v1611, -inf
      %1616 = vmax.xlane.f32.xlu0 %v1615
      %v1617 = vpop.xlane.xlu0 %1616
      %v1618 = vmax.f32 %v1614, %v1617
      %v1619 = vrot.slane %v1618, 4
      %v1620 = vmax.f32 %v1618, %v1619
      %v1621 = vrot.slane %v1620, 2
      %v1622 = vmax.f32 %v1620, %v1621
      %v1623 = vrot.slane %v1622, 1
      %v1624 = vmax.f32 %v1622, %v1623
      %s1625 = vtos %v1624
      %p1626 = scmp.lt.f32.partialorder %s1625, 1e-05
      %p1627 = scmp.eq.s32.totalorder %s1603, 0
      %s1628 = scalar_select %p1627, 1, 0
      %v1629 = vstv %s1628
      %vm1630 = vcmp.eq.s32.totalorder %v1629, 1
      %v1631 = vsel %vm1630, %v1606, %v260
      %v1632 = vsel %vm1630, %v1607, %v261
      %p1633 = scmp.ne.s32.totalorder %s1603, 0
      %p1634 = por %p1633, %p1626
      %s1635 = scalar_select %p1634, 1, %s262
      %s1636 = sadd.s32 %s255, 1
    $region22: #{tpu_custom_call.1} parent=1 // loop_footer
      _
    $region23: #{tpu_custom_call.1} parent=1 // loop_footer_branch
      %254 = sbr.rel target = $region19
    $region24: #{tpu_custom_call.1} parent=1 // loop_exit
      _
    %v1637 = vmul.f32 %v180, %v260
    %v1638 = vmul.f32 %v192, %v261
    %v1639 = vsel %vm193, %v1637, 0.0
    %1640 = vadd.xlane.f32.xlu0 %v1639
    %v1641 = vpop.xlane.xlu0 %1640
    %v1642 = vsel %vm193, %v1638, 0.0
    %1643 = vadd.xlane.f32.xlu0 %v1642
    %v1644 = vpop.xlane.xlu0 %1643
    %v1645 = vrot.slane %v1641, 4
    %v1646 = vadd.f32 %v1641, %v1645
    %v1647 = vrot.slane %v1646, 2
    %v1648 = vadd.f32 %v1646, %v1647
    %v1649 = vrot.slane %v1648, 1
    %v1650 = vadd.f32 %v1648, %v1649
    %v1651 = vrot.slane %v1644, 4
    %v1652 = vadd.f32 %v1644, %v1651
    %v1653 = vrot.slane %v1652, 2
    %v1654 = vadd.f32 %v1652, %v1653
    %v1655 = vrot.slane %v1654, 1
    %v1656 = vadd.f32 %v1654, %v1655
    %vm1657 = vcmask 0
    %1658 = vst.msk [vmem:[%s2] sm:$0x1] %vm1657, %v1650
    %1659 = vst.msk [vmem:[%s2 + $0x1] sm:$0x1] %vm1657, %v1656
    // Predicated region
    $region25: #{tpu_custom_call.1} parent=1 // pred_check
      _
    $region26: #{tpu_custom_call.1} parent=1 // pred_check_branch
      %1661 = sbr.rel (0) target = $region28
    $region27: #{tpu_custom_call.1} parent=1 // pred_region
      _
    $region28: #{tpu_custom_call.1} parent=1 // pred_fallthru
      _
    // Predicated region
    $region29: #{tpu_custom_call.1} parent=1 // pred_check
      _
    $region30: #{tpu_custom_call.1} parent=1 // pred_check_branch
      %1663 = sbr.rel (0) target = $region32
    $region31: #{tpu_custom_call.1} parent=1 // pred_region
      _
    $region32: #{tpu_custom_call.1} parent=1 // pred_fallthru
      _
    %1664 = vsyncpa [#allocation3], 1
    %1665 = vsyncpa [#allocation5], 1

</llo_original>
